<compile_context>
chip_gen: v7x
topology: tpu7x:2x2x1
jax: 0.10.0
libtpu: 0.0.40
codegen_flags: <defaults>
</compile_context>

<pallas_src>
import jax
import jax.numpy as jnp
from jax.experimental import pallas as pl
from jax.experimental.pallas import tpu as pltpu


def pointnet_kernel(x_ref,
                    w1_ref, s1_ref, b1_ref,
                    w2_ref, s2_ref, b2_ref,
                    w3_ref, s3_ref, b3_ref,
                    w4_ref, s4_ref, b4_ref,
                    w5_ref, s5_ref, b5_ref,
                    w6_ref, s6_ref, b6_ref,
                    w7_ref, b7_ref,
                    out_ref,
                    pool_acc):
    t = pl.program_id(1)

    # Init running max-pool accumulator at the start of each point cloud.
    @pl.when(t == 0)
    def _():
        pool_acc[...] = jnp.full(pool_acc.shape, -jnp.inf, dtype=pool_acc.dtype)

    x = x_ref[0]                                   # (TN, 8) f32, cols 3..7 are zero padding

    # conv1 (C_in=3) on the VPU: three broadcast FMAs (avoids a K=3 MXU dot).
    h = x[:, 0:1] * w1_ref[0:1, :]
    h = h + x[:, 1:2] * w1_ref[1:2, :]
    h = h + x[:, 2:3] * w1_ref[2:3, :]
    h = jnp.maximum(h * s1_ref[...] + b1_ref[...], 0.0)          # (TN, 64) f32

    def conv_bn_relu(h, w_ref, s_ref, b_ref):
        # bf16 MXU matmul with f32 accumulation; BN scale/bias + ReLU in f32.
        y = jnp.dot(h.astype(jnp.bfloat16), w_ref[...],
                    preferred_element_type=jnp.float32)
        return jnp.maximum(y * s_ref[...] + b_ref[...], 0.0)

    h = conv_bn_relu(h, w2_ref, s2_ref, b2_ref)    # (TN, 64)
    h = conv_bn_relu(h, w3_ref, s3_ref, b3_ref)    # (TN, 64)
    h = conv_bn_relu(h, w4_ref, s4_ref, b4_ref)    # (TN, 128)
    h = conv_bn_relu(h, w5_ref, s5_ref, b5_ref)    # (TN, E)

    # Global adaptive_max_pool1d(.,1): per-tile max over points, then a
    # running elementwise max into the VMEM accumulator.
    pool_acc[...] = jnp.maximum(pool_acc[...], jnp.max(h, axis=0, keepdims=True))

    # Head only on the last point tile of this point cloud.
    @pl.when(t == pl.num_programs(1) - 1)
    def _():
        pooled = pool_acc[...]                                    # (1, E) f32
        y = jnp.dot(pooled.astype(jnp.bfloat16), w6_ref[...],
                    preferred_element_type=jnp.float32)
        y = jnp.maximum(y * s6_ref[...] + b6_ref[...], 0.0)       # (1, 512)
        # TODO(synk): Dropout (dp1) is the inference-mode identity.
        out = jnp.dot(y.astype(jnp.bfloat16), w7_ref[...],
                      preferred_element_type=jnp.float32) + b7_ref[...]
        out_ref[0] = out                                          # (1, out_pad), lane-dense


def fold_bn(gamma, beta, running_mean, running_var, eps=1e-5):
    scale = gamma / jnp.sqrt(running_var + eps)
    bias = beta - running_mean * scale
    # shaped (1, C) so they broadcast against (rows, C) activations in-kernel
    return scale[None, :].astype(jnp.float32), bias[None, :].astype(jnp.float32)


def init_params(key, emb_dims=64, output_channels=2):
    """Deterministic synthetic parameters, shapes matching the PyTorch module."""
    dims = [3, 64, 64, 64, 128, emb_dims]          # conv1..conv5 channel sizes
    keys = jax.random.split(key, 20)
    ki = iter(range(20))
    params = {}

    # conv1..conv5 (kernel_size=1, bias=False) + bn1..bn5
    for i in range(5):
        c_in, c_out = dims[i], dims[i + 1]
        w = jax.random.normal(keys[next(ki)], (c_in, c_out), jnp.float32) * 0.1
        gamma = 1.0 + 0.05 * jax.random.normal(keys[next(ki)], (c_out,), jnp.float32)
        beta = 0.05 * jax.random.normal(keys[next(ki)], (c_out,), jnp.float32)
        s, b = fold_bn(gamma, beta, jnp.zeros((c_out,)), jnp.ones((c_out,)))
        params[f"w{i + 1}"] = w
        params[f"s{i + 1}"] = s
        params[f"b{i + 1}"] = b

    # linear1 (emb_dims -> 512, no bias) + bn6
    w6 = jax.random.normal(keys[next(ki)], (emb_dims, 512), jnp.float32) * 0.05
    gamma6 = 1.0 + 0.05 * jax.random.normal(keys[next(ki)], (512,), jnp.float32)
    beta6 = 0.05 * jax.random.normal(keys[next(ki)], (512,), jnp.float32)
    s6, b6 = fold_bn(gamma6, beta6, jnp.zeros((512,)), jnp.ones((512,)))
    params["w6"], params["s6"], params["b6"] = w6, s6, b6

    # linear2 (512 -> output_channels, with bias)
    params["w7"] = jax.random.normal(keys[next(ki)], (512, output_channels), jnp.float32) * 0.05
    params["b7"] = 0.05 * jax.random.normal(keys[next(ki)], (1, output_channels), jnp.float32)
    return params


def prepare_params(params, output_channels):
    """Cast matmul weights to bf16 once; pad linear2 to a lane-dense width."""
    prep = {"out_channels": output_channels}
    prep["w1"] = params["w1"].astype(jnp.float32)     # used on the VPU, keep f32
    for i in range(1, 7):
        prep[f"s{i}"] = params[f"s{i}"].astype(jnp.float32)
        prep[f"b{i}"] = params[f"b{i}"].astype(jnp.float32)
    for i in range(2, 7):
        prep[f"w{i}"] = params[f"w{i}"].astype(jnp.bfloat16)
    out_pad = max(128, ((output_channels + 127) // 128) * 128)
    prep["w7"] = jnp.pad(params["w7"], ((0, 0), (0, out_pad - output_channels))).astype(jnp.bfloat16)
    prep["b7"] = jnp.pad(params["b7"], ((0, 0), (0, out_pad - output_channels))).astype(jnp.float32)
    return prep


def _choose_point_tile(n, max_tile):
    """Largest point tile <= max_tile that divides N (multiple of 8), else full N."""
    if n <= max_tile:
        return n
    start = max_tile - (max_tile % 8)
    for cand in range(start, 7, -8):
        if n % cand == 0:
            return cand
    return n


def pointnet_forward(x_bcn, prep, point_tile=1024):
    """x_bcn: (B, 3, N) float32, PyTorch NCW convention."""
    B, c_in, N = x_bcn.shape
    assert c_in == 3, c_in

    # Zero-pad channels 3 -> 8 *before* the transpose so no last-dim-3 array
    # (lane-sparse layout) is ever materialized.
    x_p = jnp.pad(x_bcn.astype(jnp.float32), ((0, 0), (0, 5), (0, 0)))   # (B, 8, N)
    x_p = jnp.transpose(x_p, (0, 2, 1))                                  # (B, N, 8)

    tn = _choose_point_tile(N, point_tile)
    num_tiles = N // tn

    out_pad = prep["w7"].shape[1]
    emb_dims = prep["w6"].shape[0]

    weight_args = [
        prep["w1"], prep["s1"], prep["b1"],
        prep["w2"], prep["s2"], prep["b2"],
        prep["w3"], prep["s3"], prep["b3"],
        prep["w4"], prep["s4"], prep["b4"],
        prep["w5"], prep["s5"], prep["b5"],
        prep["w6"], prep["s6"], prep["b6"],
        prep["w7"], prep["b7"],
    ]

    def full_spec(arr):
        # Small parameter, fully resident: constant block index across the grid
        # so Pallas keeps it in VMEM without re-DMA.
        return pl.BlockSpec(arr.shape, lambda b, t: (0,) * arr.ndim)

    in_specs = [pl.BlockSpec((1, tn, 8), lambda b, t: (b, t, 0))] \
        + [full_spec(a) for a in weight_args]
    out_specs = pl.BlockSpec((1, 1, out_pad), lambda b, t: (b, 0, 0))

    out = pl.pallas_call(
        pointnet_kernel,
        out_shape=jax.ShapeDtypeStruct((B, 1, out_pad), jnp.float32),
        grid_spec=pltpu.PrefetchScalarGridSpec(
            num_scalar_prefetch=0,
            grid=(B, num_tiles),
            in_specs=in_specs,
            out_specs=out_specs,
            scratch_shapes=[pltpu.VMEM((1, emb_dims), jnp.float32)],
        ),
        compiler_params=pltpu.CompilerParams(
            dimension_semantics=("parallel", "arbitrary")),
    )(x_p, *weight_args)

    return out[:, 0, :prep["out_channels"]]


def pointnet_reference(x_bcn, prep):
    """Pure-JAX reference (emulates the kernel's bf16-operand dots)."""
    x = jnp.transpose(x_bcn.astype(jnp.float32), (0, 2, 1))              # (B, N, 3)
    h = jnp.einsum("bnk,kc->bnc", x, prep["w1"])                         # conv1 in f32
    h = jnp.maximum(h * prep["s1"] + prep["b1"], 0.0)
    for i in range(2, 6):
        y = jnp.einsum("bnc,cd->bnd", h.astype(jnp.bfloat16), prep[f"w{i}"],
                       preferred_element_type=jnp.float32)
        h = jnp.maximum(y * prep[f"s{i}"] + prep[f"b{i}"], 0.0)
    pooled = jnp.max(h, axis=1)                                          # (B, E)
    y = jnp.dot(pooled.astype(jnp.bfloat16), prep["w6"],
                preferred_element_type=jnp.float32)
    y = jnp.maximum(y * prep["s6"] + prep["b6"], 0.0)
    out = jnp.dot(y.astype(jnp.bfloat16), prep["w7"],
                  preferred_element_type=jnp.float32) + prep["b7"]
    return out[:, :prep["out_channels"]]


if __name__ == "__main__":
    key = jax.random.PRNGKey(0)
    kx, kp = jax.random.split(key)

    # Small deterministic test. (Benchmark at B>=16, N>=1024, emb_dims>=512 for
    # meaningful perf numbers; this size only exercises correctness + the grid.)
    B, N = 4, 256
    emb_dims, output_channels = 64, 2

    x = jax.random.normal(kx, (B, 3, N), dtype=jnp.float32)
    params = init_params(kp, emb_dims=emb_dims, output_channels=output_channels)
    prep = prepare_params(params, output_channels)

    # point_tile=128 -> grid=(4, 2): exercises the point-axis reduction + pool accumulator.
    out = pointnet_forward(x, prep, point_tile=128)
    out = jax.block_until_ready(out)

    assert out.shape == (B, output_channels), out.shape
    ref = pointnet_reference(x, prep)
    assert jnp.allclose(out, ref, rtol=1e-2, atol=1e-2), float(jnp.max(jnp.abs(out - ref)))

    print("KERNEL_OK")
</pallas_src>

<mosaic_0001>
module attributes {stable_mosaic.version = 11 : i64} {
  func.func @pointnet_kernel(%arg0: i32, %arg1: i32, %arg2: memref<1x128x8xf32, #tpu.memory_space<vmem>>, %arg3: memref<3x64xf32, #tpu.memory_space<vmem>>, %arg4: memref<1x64xf32, #tpu.memory_space<vmem>>, %arg5: memref<1x64xf32, #tpu.memory_space<vmem>>, %arg6: memref<64x64xbf16, #tpu.memory_space<vmem>>, %arg7: memref<1x64xf32, #tpu.memory_space<vmem>>, %arg8: memref<1x64xf32, #tpu.memory_space<vmem>>, %arg9: memref<64x64xbf16, #tpu.memory_space<vmem>>, %arg10: memref<1x64xf32, #tpu.memory_space<vmem>>, %arg11: memref<1x64xf32, #tpu.memory_space<vmem>>, %arg12: memref<64x128xbf16, #tpu.memory_space<vmem>>, %arg13: memref<1x128xf32, #tpu.memory_space<vmem>>, %arg14: memref<1x128xf32, #tpu.memory_space<vmem>>, %arg15: memref<128x64xbf16, #tpu.memory_space<vmem>>, %arg16: memref<1x64xf32, #tpu.memory_space<vmem>>, %arg17: memref<1x64xf32, #tpu.memory_space<vmem>>, %arg18: memref<64x512xbf16, #tpu.memory_space<vmem>>, %arg19: memref<1x512xf32, #tpu.memory_space<vmem>>, %arg20: memref<1x512xf32, #tpu.memory_space<vmem>>, %arg21: memref<512x128xbf16, #tpu.memory_space<vmem>>, %arg22: memref<1x128xf32, #tpu.memory_space<vmem>>, %arg23: memref<1x1x128xf32, #tpu.memory_space<vmem>>, %arg24: memref<1x64xf32, #tpu.memory_space<vmem>>) attributes {dimension_semantics = [#tpu.dimension_semantics<parallel>, #tpu.dimension_semantics<arbitrary>], iteration_bounds = array<i64: 4, 2>, scalar_prefetch = 0 : i64, scratch_operands = 1 : i64, tpu.core_type = #tpu.core_type<tc>, window_params = [{transform_indices = @transform_0, window_bounds = array<i64: 1, 128, 8>}, {pipeline_mode = #tpu.pipeline_mode<synchronous>, transform_indices = @transform_1, window_bounds = array<i64: 3, 64>}, {pipeline_mode = #tpu.pipeline_mode<synchronous>, transform_indices = @transform_2, window_bounds = array<i64: 1, 64>}, {pipeline_mode = #tpu.pipeline_mode<synchronous>, transform_indices = @transform_3, window_bounds = array<i64: 1, 64>}, {pipeline_mode = #tpu.pipeline_mode<synchronous>, transform_indices = @transform_4, window_bounds = array<i64: 64, 64>}, {pipeline_mode = #tpu.pipeline_mode<synchronous>, transform_indices = @transform_5, window_bounds = array<i64: 1, 64>}, {pipeline_mode = #tpu.pipeline_mode<synchronous>, transform_indices = @transform_6, window_bounds = array<i64: 1, 64>}, {pipeline_mode = #tpu.pipeline_mode<synchronous>, transform_indices = @transform_7, window_bounds = array<i64: 64, 64>}, {pipeline_mode = #tpu.pipeline_mode<synchronous>, transform_indices = @transform_8, window_bounds = array<i64: 1, 64>}, {pipeline_mode = #tpu.pipeline_mode<synchronous>, transform_indices = @transform_9, window_bounds = array<i64: 1, 64>}, {pipeline_mode = #tpu.pipeline_mode<synchronous>, transform_indices = @transform_10, window_bounds = array<i64: 64, 128>}, {pipeline_mode = #tpu.pipeline_mode<synchronous>, transform_indices = @transform_11, window_bounds = array<i64: 1, 128>}, {pipeline_mode = #tpu.pipeline_mode<synchronous>, transform_indices = @transform_12, window_bounds = array<i64: 1, 128>}, {pipeline_mode = #tpu.pipeline_mode<synchronous>, transform_indices = @transform_13, window_bounds = array<i64: 128, 64>}, {pipeline_mode = #tpu.pipeline_mode<synchronous>, transform_indices = @transform_14, window_bounds = array<i64: 1, 64>}, {pipeline_mode = #tpu.pipeline_mode<synchronous>, transform_indices = @transform_15, window_bounds = array<i64: 1, 64>}, {pipeline_mode = #tpu.pipeline_mode<synchronous>, transform_indices = @transform_16, window_bounds = array<i64: 64, 512>}, {pipeline_mode = #tpu.pipeline_mode<synchronous>, transform_indices = @transform_17, window_bounds = array<i64: 1, 512>}, {pipeline_mode = #tpu.pipeline_mode<synchronous>, transform_indices = @transform_18, window_bounds = array<i64: 1, 512>}, {pipeline_mode = #tpu.pipeline_mode<synchronous>, transform_indices = @transform_19, window_bounds = array<i64: 512, 128>}, {pipeline_mode = #tpu.pipeline_mode<synchronous>, transform_indices = @transform_20, window_bounds = array<i64: 1, 128>}, {transform_indices = @transform_21, window_bounds = array<i64: 1, 1, 128>}]} {
    %c0_i32 = arith.constant 0 : i32
    %0 = arith.cmpi eq, %arg1, %c0_i32 : i32
    %1 = arith.extui %0 : i1 to i32
    %c0_i32_0 = arith.constant 0 : i32
    %2 = arith.cmpi ne, %1, %c0_i32_0 : i32
    scf.if %2 {
      %cst_49 = arith.constant 0xFF800000 : f32
      %82 = vector.broadcast %cst_49 : f32 to vector<1x64xf32>
      %c0_50 = arith.constant 0 : index
      %c0_51 = arith.constant 0 : index
      %83 = vector.load %arg24[%c0_50, %c0_51] : memref<1x64xf32, #tpu.memory_space<vmem>>, vector<1x64xf32>
      tpu.vector_store %arg24[%c0_50, %c0_51], %82 {strides = array<i32>} : memref<1x64xf32, #tpu.memory_space<vmem>>, vector<1x64xf32>,
    } else {
    }
    %c0 = arith.constant 0 : index
    %c0_1 = arith.constant 0 : index
    %c0_2 = arith.constant 0 : index
    %3 = vector.load %arg2[%c0, %c0_1, %c0_2] : memref<1x128x8xf32, #tpu.memory_space<vmem>>, vector<1x128x8xf32>
    %4 = vector.shape_cast %3 : vector<1x128x8xf32> to vector<128x8xf32>
    %5 = vector.extract_strided_slice %4 {offsets = [0, 0], sizes = [128, 1], strides = [1, 1]} : vector<128x8xf32> to vector<128x1xf32>
    %c0_3 = arith.constant 0 : index
    %c0_4 = arith.constant 0 : index
    %6 = vector.load %arg3[%c0_3, %c0_4] : memref<3x64xf32, #tpu.memory_space<vmem>>, vector<1x64xf32>
    %7 = vector.broadcast %5 : vector<128x1xf32> to vector<128x64xf32>
    %8 = vector.broadcast %6 : vector<1x64xf32> to vector<128x64xf32>
    %9 = arith.mulf %7, %8 : vector<128x64xf32>
    %10 = vector.extract_strided_slice %4 {offsets = [0, 1], sizes = [128, 1], strides = [1, 1]} : vector<128x8xf32> to vector<128x1xf32>
    %c1 = arith.constant 1 : index
    %c0_5 = arith.constant 0 : index
    %11 = vector.load %arg3[%c1, %c0_5] : memref<3x64xf32, #tpu.memory_space<vmem>>, vector<1x64xf32>
    %12 = vector.broadcast %10 : vector<128x1xf32> to vector<128x64xf32>
    %13 = vector.broadcast %11 : vector<1x64xf32> to vector<128x64xf32>
    %14 = arith.mulf %12, %13 : vector<128x64xf32>
    %15 = arith.addf %9, %14 : vector<128x64xf32>
    %16 = vector.extract_strided_slice %4 {offsets = [0, 2], sizes = [128, 1], strides = [1, 1]} : vector<128x8xf32> to vector<128x1xf32>
    %c2 = arith.constant 2 : index
    %c0_6 = arith.constant 0 : index
    %17 = vector.load %arg3[%c2, %c0_6] : memref<3x64xf32, #tpu.memory_space<vmem>>, vector<1x64xf32>
    %18 = vector.broadcast %16 : vector<128x1xf32> to vector<128x64xf32>
    %19 = vector.broadcast %17 : vector<1x64xf32> to vector<128x64xf32>
    %20 = arith.mulf %18, %19 : vector<128x64xf32>
    %21 = arith.addf %15, %20 : vector<128x64xf32>
    %c0_7 = arith.constant 0 : index
    %c0_8 = arith.constant 0 : index
    %22 = vector.load %arg4[%c0_7, %c0_8] : memref<1x64xf32, #tpu.memory_space<vmem>>, vector<1x64xf32>
    %23 = vector.broadcast %22 : vector<1x64xf32> to vector<128x64xf32>
    %24 = arith.mulf %21, %23 : vector<128x64xf32>
    %c0_9 = arith.constant 0 : index
    %c0_10 = arith.constant 0 : index
    %25 = vector.load %arg5[%c0_9, %c0_10] : memref<1x64xf32, #tpu.memory_space<vmem>>, vector<1x64xf32>
    %26 = vector.broadcast %25 : vector<1x64xf32> to vector<128x64xf32>
    %27 = arith.addf %24, %26 : vector<128x64xf32>
    %cst = arith.constant 0.000000e+00 : f32
    %28 = vector.broadcast %cst : f32 to vector<128x64xf32>
    %29 = arith.maximumf %27, %28 : vector<128x64xf32>
    %30 = arith.truncf %29 : vector<128x64xf32> to vector<128x64xbf16>
    %c0_11 = arith.constant 0 : index
    %c0_12 = arith.constant 0 : index
    %31 = vector.load %arg6[%c0_11, %c0_12] : memref<64x64xbf16, #tpu.memory_space<vmem>>, vector<64x64xbf16>
    %cst_13 = arith.constant dense<0.000000e+00> : vector<128x64xf32>
    %32 = tpu.matmul %30, %31, %cst_13 {dimension_numbers = #tpu.dot_dimension_numbers<[1], [0], [0], [1], [0, 0, 1, 1], [], []>} : vector<128x64xbf16>, vector<64x64xbf16>, vector<128x64xf32> -> vector<128x64xf32>
    %c0_14 = arith.constant 0 : index
    %c0_15 = arith.constant 0 : index
    %33 = vector.load %arg7[%c0_14, %c0_15] : memref<1x64xf32, #tpu.memory_space<vmem>>, vector<1x64xf32>
    %34 = vector.broadcast %33 : vector<1x64xf32> to vector<128x64xf32>
    %35 = arith.mulf %32, %34 : vector<128x64xf32>
    %c0_16 = arith.constant 0 : index
    %c0_17 = arith.constant 0 : index
    %36 = vector.load %arg8[%c0_16, %c0_17] : memref<1x64xf32, #tpu.memory_space<vmem>>, vector<1x64xf32>
    %37 = vector.broadcast %36 : vector<1x64xf32> to vector<128x64xf32>
    %38 = arith.addf %35, %37 : vector<128x64xf32>
    %cst_18 = arith.constant 0.000000e+00 : f32
    %39 = vector.broadcast %cst_18 : f32 to vector<128x64xf32>
    %40 = arith.maximumf %38, %39 : vector<128x64xf32>
    %41 = arith.truncf %40 : vector<128x64xf32> to vector<128x64xbf16>
    %c0_19 = arith.constant 0 : index
    %c0_20 = arith.constant 0 : index
    %42 = vector.load %arg9[%c0_19, %c0_20] : memref<64x64xbf16, #tpu.memory_space<vmem>>, vector<64x64xbf16>
    %cst_21 = arith.constant dense<0.000000e+00> : vector<128x64xf32>
    %43 = tpu.matmul %41, %42, %cst_21 {dimension_numbers = #tpu.dot_dimension_numbers<[1], [0], [0], [1], [0, 0, 1, 1], [], []>} : vector<128x64xbf16>, vector<64x64xbf16>, vector<128x64xf32> -> vector<128x64xf32>
    %c0_22 = arith.constant 0 : index
    %c0_23 = arith.constant 0 : index
    %44 = vector.load %arg10[%c0_22, %c0_23] : memref<1x64xf32, #tpu.memory_space<vmem>>, vector<1x64xf32>
    %45 = vector.broadcast %44 : vector<1x64xf32> to vector<128x64xf32>
    %46 = arith.mulf %43, %45 : vector<128x64xf32>
    %c0_24 = arith.constant 0 : index
    %c0_25 = arith.constant 0 : index
    %47 = vector.load %arg11[%c0_24, %c0_25] : memref<1x64xf32, #tpu.memory_space<vmem>>, vector<1x64xf32>
    %48 = vector.broadcast %47 : vector<1x64xf32> to vector<128x64xf32>
    %49 = arith.addf %46, %48 : vector<128x64xf32>
    %cst_26 = arith.constant 0.000000e+00 : f32
    %50 = vector.broadcast %cst_26 : f32 to vector<128x64xf32>
    %51 = arith.maximumf %49, %50 : vector<128x64xf32>
    %52 = arith.truncf %51 : vector<128x64xf32> to vector<128x64xbf16>
    %c0_27 = arith.constant 0 : index
    %c0_28 = arith.constant 0 : index
    %53 = vector.load %arg12[%c0_27, %c0_28] : memref<64x128xbf16, #tpu.memory_space<vmem>>, vector<64x128xbf16>
    %cst_29 = arith.constant dense<0.000000e+00> : vector<128x128xf32>
    %54 = tpu.matmul %52, %53, %cst_29 {dimension_numbers = #tpu.dot_dimension_numbers<[1], [0], [0], [1], [0, 0, 1, 1], [], []>} : vector<128x64xbf16>, vector<64x128xbf16>, vector<128x128xf32> -> vector<128x128xf32>
    %c0_30 = arith.constant 0 : index
    %c0_31 = arith.constant 0 : index
    %55 = vector.load %arg13[%c0_30, %c0_31] : memref<1x128xf32, #tpu.memory_space<vmem>>, vector<1x128xf32>
    %56 = vector.broadcast %55 : vector<1x128xf32> to vector<128x128xf32>
    %57 = arith.mulf %54, %56 : vector<128x128xf32>
    %c0_32 = arith.constant 0 : index
    %c0_33 = arith.constant 0 : index
    %58 = vector.load %arg14[%c0_32, %c0_33] : memref<1x128xf32, #tpu.memory_space<vmem>>, vector<1x128xf32>
    %59 = vector.broadcast %58 : vector<1x128xf32> to vector<128x128xf32>
    %60 = arith.addf %57, %59 : vector<128x128xf32>
    %cst_34 = arith.constant 0.000000e+00 : f32
    %61 = vector.broadcast %cst_34 : f32 to vector<128x128xf32>
    %62 = arith.maximumf %60, %61 : vector<128x128xf32>
    %63 = arith.truncf %62 : vector<128x128xf32> to vector<128x128xbf16>
    %c0_35 = arith.constant 0 : index
    %c0_36 = arith.constant 0 : index
    %64 = vector.load %arg15[%c0_35, %c0_36] : memref<128x64xbf16, #tpu.memory_space<vmem>>, vector<128x64xbf16>
    %cst_37 = arith.constant dense<0.000000e+00> : vector<128x64xf32>
    %65 = tpu.matmul %63, %64, %cst_37 {dimension_numbers = #tpu.dot_dimension_numbers<[1], [0], [0], [1], [0, 0, 1, 1], [], []>} : vector<128x128xbf16>, vector<128x64xbf16>, vector<128x64xf32> -> vector<128x64xf32>
    %c0_38 = arith.constant 0 : index
    %c0_39 = arith.constant 0 : index
    %66 = vector.load %arg16[%c0_38, %c0_39] : memref<1x64xf32, #tpu.memory_space<vmem>>, vector<1x64xf32>
    %67 = vector.broadcast %66 : vector<1x64xf32> to vector<128x64xf32>
    %68 = arith.mulf %65, %67 : vector<128x64xf32>
    %c0_40 = arith.constant 0 : index
    %c0_41 = arith.constant 0 : index
    %69 = vector.load %arg17[%c0_40, %c0_41] : memref<1x64xf32, #tpu.memory_space<vmem>>, vector<1x64xf32>
    %70 = vector.broadcast %69 : vector<1x64xf32> to vector<128x64xf32>
    %71 = arith.addf %68, %70 : vector<128x64xf32>
    %cst_42 = arith.constant 0.000000e+00 : f32
    %72 = vector.broadcast %cst_42 : f32 to vector<128x64xf32>
    %73 = arith.maximumf %71, %72 : vector<128x64xf32>
    %c0_43 = arith.constant 0 : index
    %c0_44 = arith.constant 0 : index
    %74 = vector.load %arg24[%c0_43, %c0_44] : memref<1x64xf32, #tpu.memory_space<vmem>>, vector<1x64xf32>
    %cst_45 = arith.constant dense<0xFF800000> : vector<64xf32>
    %75 = vector.multi_reduction <maximumf>, %73, %cst_45 [0] : vector<128x64xf32> to vector<64xf32>
    %76 = vector.shape_cast %75 : vector<64xf32> to vector<1x64xf32>
    %77 = arith.maximumf %74, %76 : vector<1x64xf32>
    %c0_46 = arith.constant 0 : index
    %c0_47 = arith.constant 0 : index
    %78 = vector.load %arg24[%c0_46, %c0_47] : memref<1x64xf32, #tpu.memory_space<vmem>>, vector<1x64xf32>
    tpu.vector_store %arg24[%c0_46, %c0_47], %77 {strides = array<i32>} : memref<1x64xf32, #tpu.memory_space<vmem>>, vector<1x64xf32>,
    %c1_i32 = arith.constant 1 : i32
    %79 = arith.cmpi eq, %arg1, %c1_i32 : i32
    %80 = arith.extui %79 : i1 to i32
    %c0_i32_48 = arith.constant 0 : i32
    %81 = arith.cmpi ne, %80, %c0_i32_48 : i32
    scf.if %81 {
      %c0_49 = arith.constant 0 : index
      %c0_50 = arith.constant 0 : index
      %82 = vector.load %arg24[%c0_49, %c0_50] : memref<1x64xf32, #tpu.memory_space<vmem>>, vector<1x64xf32>
      %83 = arith.truncf %82 : vector<1x64xf32> to vector<1x64xbf16>
      %c0_51 = arith.constant 0 : index
      %c0_52 = arith.constant 0 : index
      %84 = vector.load %arg18[%c0_51, %c0_52] : memref<64x512xbf16, #tpu.memory_space<vmem>>, vector<64x512xbf16>
      %cst_53 = arith.constant dense<0.000000e+00> : vector<1x512xf32>
      %85 = tpu.matmul %83, %84, %cst_53 {dimension_numbers = #tpu.dot_dimension_numbers<[1], [0], [0], [1], [0, 0, 1, 1], [], []>} : vector<1x64xbf16>, vector<64x512xbf16>, vector<1x512xf32> -> vector<1x512xf32>
      %c0_54 = arith.constant 0 : index
      %c0_55 = arith.constant 0 : index
      %86 = vector.load %arg19[%c0_54, %c0_55] : memref<1x512xf32, #tpu.memory_space<vmem>>, vector<1x512xf32>
      %87 = arith.mulf %85, %86 : vector<1x512xf32>
      %c0_56 = arith.constant 0 : index
      %c0_57 = arith.constant 0 : index
      %88 = vector.load %arg20[%c0_56, %c0_57] : memref<1x512xf32, #tpu.memory_space<vmem>>, vector<1x512xf32>
      %89 = arith.addf %87, %88 : vector<1x512xf32>
      %cst_58 = arith.constant 0.000000e+00 : f32
      %90 = vector.broadcast %cst_58 : f32 to vector<1x512xf32>
      %91 = arith.maximumf %89, %90 : vector<1x512xf32>
      %92 = arith.truncf %91 : vector<1x512xf32> to vector<1x512xbf16>
      %c0_59 = arith.constant 0 : index
      %c0_60 = arith.constant 0 : index
      %93 = vector.load %arg21[%c0_59, %c0_60] : memref<512x128xbf16, #tpu.memory_space<vmem>>, vector<512x128xbf16>
      %cst_61 = arith.constant dense<0.000000e+00> : vector<1x128xf32>
      %94 = tpu.matmul %92, %93, %cst_61 {dimension_numbers = #tpu.dot_dimension_numbers<[1], [0], [0], [1], [0, 0, 1, 1], [], []>} : vector<1x512xbf16>, vector<512x128xbf16>, vector<1x128xf32> -> vector<1x128xf32>
      %c0_62 = arith.constant 0 : index
      %c0_63 = arith.constant 0 : index
      %95 = vector.load %arg22[%c0_62, %c0_63] : memref<1x128xf32, #tpu.memory_space<vmem>>, vector<1x128xf32>
      %96 = arith.addf %94, %95 : vector<1x128xf32>
      %c0_64 = arith.constant 0 : index
      %c0_65 = arith.constant 0 : index
      %c0_66 = arith.constant 0 : index
      %97 = vector.load %arg23[%c0_64, %c0_65, %c0_66] : memref<1x1x128xf32, #tpu.memory_space<vmem>>, vector<1x1x128xf32>
      %98 = vector.shape_cast %97 : vector<1x1x128xf32> to vector<1x128xf32>
      %99 = vector.shape_cast %96 : vector<1x128xf32> to vector<1x1x128xf32>
      tpu.vector_store %arg23[%c0_64, %c0_65, %c0_66], %99 {strides = array<i32>} : memref<1x1x128xf32, #tpu.memory_space<vmem>>, vector<1x1x128xf32>,
    } else {
    }
    return
  }
  func.func @transform_0(%arg0: i32, %arg1: i32) -> (i32, i32, i32) {
    %c0_i32 = arith.constant 0 : i32
    %c0_i32_0 = arith.constant 0 : i32
    return %arg0, %arg1, %c0_i32 : i32, i32, i32
  }
  func.func @transform_1(%arg0: i32, %arg1: i32) -> (i32, i32) {
    %c0_i32 = arith.constant 0 : i32
    %c0_i32_0 = arith.constant 0 : i32
    %c0_i32_1 = arith.constant 0 : i32
    return %c0_i32, %c0_i32_0 : i32, i32
  }
  func.func @transform_2(%arg0: i32, %arg1: i32) -> (i32, i32) {
    %c0_i32 = arith.constant 0 : i32
    %c0_i32_0 = arith.constant 0 : i32
    %c0_i32_1 = arith.constant 0 : i32
    return %c0_i32, %c0_i32_0 : i32, i32
  }
  func.func @transform_3(%arg0: i32, %arg1: i32) -> (i32, i32) {
    %c0_i32 = arith.constant 0 : i32
    %c0_i32_0 = arith.constant 0 : i32
    %c0_i32_1 = arith.constant 0 : i32
    return %c0_i32, %c0_i32_0 : i32, i32
  }
  func.func @transform_4(%arg0: i32, %arg1: i32) -> (i32, i32) {
    %c0_i32 = arith.constant 0 : i32
    %c0_i32_0 = arith.constant 0 : i32
    %c0_i32_1 = arith.constant 0 : i32
    return %c0_i32, %c0_i32_0 : i32, i32
  }
  func.func @transform_5(%arg0: i32, %arg1: i32) -> (i32, i32) {
    %c0_i32 = arith.constant 0 : i32
    %c0_i32_0 = arith.constant 0 : i32
    %c0_i32_1 = arith.constant 0 : i32
    return %c0_i32, %c0_i32_0 : i32, i32
  }
  func.func @transform_6(%arg0: i32, %arg1: i32) -> (i32, i32) {
    %c0_i32 = arith.constant 0 : i32
    %c0_i32_0 = arith.constant 0 : i32
    %c0_i32_1 = arith.constant 0 : i32
    return %c0_i32, %c0_i32_0 : i32, i32
  }
  func.func @transform_7(%arg0: i32, %arg1: i32) -> (i32, i32) {
    %c0_i32 = arith.constant 0 : i32
    %c0_i32_0 = arith.constant 0 : i32
    %c0_i32_1 = arith.constant 0 : i32
    return %c0_i32, %c0_i32_0 : i32, i32
  }
  func.func @transform_8(%arg0: i32, %arg1: i32) -> (i32, i32) {
    %c0_i32 = arith.constant 0 : i32
    %c0_i32_0 = arith.constant 0 : i32
    %c0_i32_1 = arith.constant 0 : i32
    return %c0_i32, %c0_i32_0 : i32, i32
  }
  func.func @transform_9(%arg0: i32, %arg1: i32) -> (i32, i32) {
    %c0_i32 = arith.constant 0 : i32
    %c0_i32_0 = arith.constant 0 : i32
    %c0_i32_1 = arith.constant 0 : i32
    return %c0_i32, %c0_i32_0 : i32, i32
  }
  func.func @transform_10(%arg0: i32, %arg1: i32) -> (i32, i32) {
    %c0_i32 = arith.constant 0 : i32
    %c0_i32_0 = arith.constant 0 : i32
    %c0_i32_1 = arith.constant 0 : i32
    return %c0_i32, %c0_i32_0 : i32, i32
  }
  func.func @transform_11(%arg0: i32, %arg1: i32) -> (i32, i32) {
    %c0_i32 = arith.constant 0 : i32
    %c0_i32_0 = arith.constant 0 : i32
    %c0_i32_1 = arith.constant 0 : i32
    return %c0_i32, %c0_i32_0 : i32, i32
  }
  func.func @transform_12(%arg0: i32, %arg1: i32) -> (i32, i32) {
    %c0_i32 = arith.constant 0 : i32
    %c0_i32_0 = arith.constant 0 : i32
    %c0_i32_1 = arith.constant 0 : i32
    return %c0_i32, %c0_i32_0 : i32, i32
  }
  func.func @transform_13(%arg0: i32, %arg1: i32) -> (i32, i32) {
    %c0_i32 = arith.constant 0 : i32
    %c0_i32_0 = arith.constant 0 : i32
    %c0_i32_1 = arith.constant 0 : i32
    return %c0_i32, %c0_i32_0 : i32, i32
  }
  func.func @transform_14(%arg0: i32, %arg1: i32) -> (i32, i32) {
    %c0_i32 = arith.constant 0 : i32
    %c0_i32_0 = arith.constant 0 : i32
    %c0_i32_1 = arith.constant 0 : i32
    return %c0_i32, %c0_i32_0 : i32, i32
  }
  func.func @transform_15(%arg0: i32, %arg1: i32) -> (i32, i32) {
    %c0_i32 = arith.constant 0 : i32
    %c0_i32_0 = arith.constant 0 : i32
    %c0_i32_1 = arith.constant 0 : i32
    return %c0_i32, %c0_i32_0 : i32, i32
  }
  func.func @transform_16(%arg0: i32, %arg1: i32) -> (i32, i32) {
    %c0_i32 = arith.constant 0 : i32
    %c0_i32_0 = arith.constant 0 : i32
    %c0_i32_1 = arith.constant 0 : i32
    return %c0_i32, %c0_i32_0 : i32, i32
  }
  func.func @transform_17(%arg0: i32, %arg1: i32) -> (i32, i32) {
    %c0_i32 = arith.constant 0 : i32
    %c0_i32_0 = arith.constant 0 : i32
    %c0_i32_1 = arith.constant 0 : i32
    return %c0_i32, %c0_i32_0 : i32, i32
  }
  func.func @transform_18(%arg0: i32, %arg1: i32) -> (i32, i32) {
    %c0_i32 = arith.constant 0 : i32
    %c0_i32_0 = arith.constant 0 : i32
    %c0_i32_1 = arith.constant 0 : i32
    return %c0_i32, %c0_i32_0 : i32, i32
  }
  func.func @transform_19(%arg0: i32, %arg1: i32) -> (i32, i32) {
    %c0_i32 = arith.constant 0 : i32
    %c0_i32_0 = arith.constant 0 : i32
    %c0_i32_1 = arith.constant 0 : i32
    return %c0_i32, %c0_i32_0 : i32, i32
  }
  func.func @transform_20(%arg0: i32, %arg1: i32) -> (i32, i32) {
    %c0_i32 = arith.constant 0 : i32
    %c0_i32_0 = arith.constant 0 : i32
    %c0_i32_1 = arith.constant 0 : i32
    return %c0_i32, %c0_i32_0 : i32, i32
  }
  func.func @transform_21(%arg0: i32, %arg1: i32) -> (i32, i32, i32) {
    %c0_i32 = arith.constant 0 : i32
    %c0_i32_0 = arith.constant 0 : i32
    %c0_i32_1 = arith.constant 0 : i32
    return %arg0, %c0_i32, %c0_i32_0 : i32, i32, i32
  }
}

</mosaic_0001>

<llo_original>
// kernel: tpu_custom_call.1
$region0: #{tpu_custom_call.1}
  #allocation0 [shape = 'u32[]', space=smem, size = 0x4, offset = 0x4, fixed_abs, tag = 'smem constant byte address 0x4 - core index']
  #allocation1 [shape = 'u32[144,128]{1,0:T(1,128)}', space=vmem, size = 0x12000, scoped, tag = 'internal scratch']
  #allocation2 [shape = 'f32[1,64]{1,0:T(1,128)}', space=vmem, size = 0x200, scoped, tag = 'scratch operand']
  %s0 = inlined_call_operand.vmem [shape: f32[4,256,8], index: 0, kind: input, shape index: {}]
  %s1 = inlined_call_operand.vmem [shape: f32[3,64], index: 1, kind: input, shape index: {}]
  %s2 = inlined_call_operand.vmem [shape: f32[1,64], index: 2, kind: input, shape index: {}]
  %s3 = inlined_call_operand.vmem [shape: f32[1,64], index: 3, kind: input, shape index: {}]
  %s4 = inlined_call_operand.vmem [shape: bf16[64,64], index: 4, kind: input, shape index: {}]
  %s5 = inlined_call_operand.vmem [shape: f32[1,64], index: 5, kind: input, shape index: {}]
  %s6 = inlined_call_operand.vmem [shape: f32[1,64], index: 6, kind: input, shape index: {}]
  %s7 = inlined_call_operand.vmem [shape: bf16[64,64], index: 7, kind: input, shape index: {}]
  %s8 = inlined_call_operand.vmem [shape: f32[1,64], index: 8, kind: input, shape index: {}]
  %s9 = inlined_call_operand.vmem [shape: f32[1,64], index: 9, kind: input, shape index: {}]
  %s10 = inlined_call_operand.vmem [shape: bf16[64,128], index: 10, kind: input, shape index: {}]
  %s11 = inlined_call_operand.vmem [shape: f32[1,128], index: 11, kind: input, shape index: {}]
  %s12 = inlined_call_operand.vmem [shape: f32[1,128], index: 12, kind: input, shape index: {}]
  %s13 = inlined_call_operand.vmem [shape: bf16[128,64], index: 13, kind: input, shape index: {}]
  %s14 = inlined_call_operand.vmem [shape: f32[1,64], index: 14, kind: input, shape index: {}]
  %s15 = inlined_call_operand.vmem [shape: f32[1,64], index: 15, kind: input, shape index: {}]
  %s16 = inlined_call_operand.vmem [shape: bf16[64,512], index: 16, kind: input, shape index: {}]
  %s17 = inlined_call_operand.vmem [shape: f32[1,512], index: 17, kind: input, shape index: {}]
  %s18 = inlined_call_operand.vmem [shape: f32[1,512], index: 18, kind: input, shape index: {}]
  %s19 = inlined_call_operand.vmem [shape: bf16[512,128], index: 19, kind: input, shape index: {}]
  %s20 = inlined_call_operand.vmem [shape: f32[1,128], index: 20, kind: input, shape index: {}]
  %s21 = inlined_call_operand.hbm [shape: f32[4,1,128], index: 21, kind: output, shape index: {}]
  %s22 = sld [smem:[#allocation0]]
  $region125: #{tpu_custom_call.1} parent=0
    _
  %s24 = ssub.s32 1, %s22
  %s25 = scalar_select 0, %s24, %s22
  $region1: #{tpu_custom_call.1} parent=0
    #allocation3 [shape = 'u8[1024]{0}', space=vmem, size = 0x400, scoped, tag = 'output window, operand 0']
    #allocation4 [shape = 's32[2]{0}', space=sflag, size = 0x8, scoped, tag = 'scoped memory for tpu_custom_call.1']
    %26 = vsyncpa [#allocation4], 0
    %s27 = scalar_lea.sflag [#allocation4], 1
    %28 = vsyncpa %s27, 0
    loop: start=0, step=1, limit=10
    $region2: #{tpu_custom_call.1} parent=1 // loop_pre_header
      _
    $region3: #{tpu_custom_call.1} parent=1 // loop_header
      %s30 = sphi 0, %s34
      %p31 = scmp.ge.s32.totalorder %s30, 10
      %s37 = sphi 0, %s49
      %s38 = sphi 0, %s45
      %s39 = sphi 0, %s37
      %s40 = sphi 0, %s38
      %s41 = sphi 0, %s39
      %s42 = sphi 0, %s40
      %s54 = sphi 0, %s56
      %s57 = sphi 0, %s54
      %s58 = sphi 0, %s57
      %s74 = sphi 0, %s58
      %s78 = sphi 0, %s78
      %s80 = sphi 0, %s78
      %s81 = sphi 0, %s80
      %s95 = sphi 0, %s81
      %s99 = sphi 0, %s99
      %s101 = sphi 0, %s99
      %s102 = sphi 0, %s101
      %s116 = sphi 0, %s102
      %s120 = sphi 0, %s120
      %s122 = sphi 0, %s120
      %s123 = sphi 0, %s122
      %s137 = sphi 0, %s123
      %s141 = sphi 0, %s141
      %s143 = sphi 0, %s141
      %s144 = sphi 0, %s143
      %s158 = sphi 0, %s144
      %s162 = sphi 0, %s162
      %s164 = sphi 0, %s162
      %s165 = sphi 0, %s164
      %s179 = sphi 0, %s165
      %s183 = sphi 0, %s183
      %s185 = sphi 0, %s183
      %s186 = sphi 0, %s185
      %s200 = sphi 0, %s186
      %s204 = sphi 0, %s204
      %s206 = sphi 0, %s204
      %s207 = sphi 0, %s206
      %s221 = sphi 0, %s207
      %s225 = sphi 0, %s225
      %s227 = sphi 0, %s225
      %s228 = sphi 0, %s227
      %s242 = sphi 0, %s228
      %s246 = sphi 0, %s246
      %s248 = sphi 0, %s246
      %s249 = sphi 0, %s248
      %s263 = sphi 0, %s249
      %s267 = sphi 0, %s267
      %s269 = sphi 0, %s267
      %s270 = sphi 0, %s269
      %s284 = sphi 0, %s270
      %s288 = sphi 0, %s288
      %s290 = sphi 0, %s288
      %s291 = sphi 0, %s290
      %s305 = sphi 0, %s291
      %s309 = sphi 0, %s309
      %s311 = sphi 0, %s309
      %s312 = sphi 0, %s311
      %s326 = sphi 0, %s312
      %s330 = sphi 0, %s330
      %s332 = sphi 0, %s330
      %s333 = sphi 0, %s332
      %s347 = sphi 0, %s333
      %s351 = sphi 0, %s351
      %s353 = sphi 0, %s351
      %s354 = sphi 0, %s353
      %s368 = sphi 0, %s354
      %s372 = sphi 0, %s372
      %s374 = sphi 0, %s372
      %s375 = sphi 0, %s374
      %s389 = sphi 0, %s375
      %s393 = sphi 0, %s393
      %s395 = sphi 0, %s393
      %s396 = sphi 0, %s395
      %s410 = sphi 0, %s396
      %s414 = sphi 0, %s414
      %s416 = sphi 0, %s414
      %s417 = sphi 0, %s416
      %s431 = sphi 0, %s417
      %s435 = sphi 0, %s435
      %s437 = sphi 0, %s435
      %s438 = sphi 0, %s437
      %s452 = sphi 0, %s438
      %s456 = sphi 0, %s456
      %s458 = sphi 0, %s456
      %s459 = sphi 0, %s458
      %s473 = sphi 0, %s459
      %s477 = sphi 0, %s477
      %s479 = sphi 0, %s477
      %s480 = sphi 0, %s479
      %s494 = sphi 0, %s480
      %s500 = sphi 0, %s502
      %s503 = sphi 0, %s500
      %s504 = sphi 0, %s503
      %s520 = sphi 0, %s504
    $region4: #{tpu_custom_call.1} parent=1 // loop_header_branch
      %33 = sbr.rel (%p31) target = $region8
    $region5: #{tpu_custom_call.1} parent=1 // loop_body
      %s35 = ssub.s32 %s30, 1
      %s36 = ssub.s32 %s30, 2
      %s43 = sadd.s32 1, %s38
      %p44 = scmp.ge.s32.totalorder %s43, 2
      %s45 = scalar_select %p44, 0, %s43
      %s46 = sadd.s32 1, %s37
      %s47 = scalar_select %p44, %s46, %s37
      %p48 = scmp.ge.s32.totalorder %s47, 4
      %s49 = scalar_select %p48, 0, %s47
      %s50 = ssub.s32 %s37, %s49
      %s51 = ssub.s32 %s38, %s45
      %s52 = sor.u32 %s50, %s51
      %p53 = scmp.eq.s32.totalorder %s52, 0
      %s55 = sadd.s32 %s54, 1
      %s56 = scalar_select %p53, %s54, %s55
      %p59 = pneg %p53
      %p60 = scmp.eq.s32.totalorder %s30, 7
      %p61 = por %p59, %p60
      %p62 = scmp.ne.s32.totalorder %s54, %s57
      %p63 = scmp.eq.s32.totalorder %s30, 0
      %p64 = por %p62, %p63
      %p65 = scmp.ne.s32.totalorder %s54, %s57
      %p66 = scmp.eq.s32.totalorder %s35, 7
      %p67 = por %p65, %p66
      %p68 = scmp.ne.s32.totalorder %s57, %s58
      %p69 = scmp.eq.s32.totalorder %s35, 0
      %p70 = por %p68, %p69
      %p71 = scmp.ne.s32.totalorder %s57, %s58
      %p72 = scmp.eq.s32.totalorder %s36, 7
      %p73 = por %p71, %p72
      %p75 = scmp.ne.s32.totalorder %s58, %s74
      %p76 = scmp.eq.s32.totalorder %s36, 0
      %p77 = por %p75, %p76
      %s79 = sadd.s32 %s78, 1
      %p82 = scmp.eq.s32.totalorder %s30, 7
      %p83 = scmp.ne.s32.totalorder %s78, %s80
      %p84 = scmp.eq.s32.totalorder %s30, 0
      %p85 = por %p83, %p84
      %p86 = scmp.ne.s32.totalorder %s78, %s80
      %p87 = scmp.eq.s32.totalorder %s35, 7
      %p88 = por %p86, %p87
      %p89 = scmp.ne.s32.totalorder %s80, %s81
      %p90 = scmp.eq.s32.totalorder %s35, 0
      %p91 = por %p89, %p90
      %p92 = scmp.ne.s32.totalorder %s80, %s81
      %p93 = scmp.eq.s32.totalorder %s36, 7
      %p94 = por %p92, %p93
      %p96 = scmp.ne.s32.totalorder %s81, %s95
      %p97 = scmp.eq.s32.totalorder %s36, 0
      %p98 = por %p96, %p97
      %s100 = sadd.s32 %s99, 1
      %p103 = scmp.eq.s32.totalorder %s30, 7
      %p104 = scmp.ne.s32.totalorder %s99, %s101
      %p105 = scmp.eq.s32.totalorder %s30, 0
      %p106 = por %p104, %p105
      %p107 = scmp.ne.s32.totalorder %s99, %s101
      %p108 = scmp.eq.s32.totalorder %s35, 7
      %p109 = por %p107, %p108
      %p110 = scmp.ne.s32.totalorder %s101, %s102
      %p111 = scmp.eq.s32.totalorder %s35, 0
      %p112 = por %p110, %p111
      %p113 = scmp.ne.s32.totalorder %s101, %s102
      %p114 = scmp.eq.s32.totalorder %s36, 7
      %p115 = por %p113, %p114
      %p117 = scmp.ne.s32.totalorder %s102, %s116
      %p118 = scmp.eq.s32.totalorder %s36, 0
      %p119 = por %p117, %p118
      %s121 = sadd.s32 %s120, 1
      %p124 = scmp.eq.s32.totalorder %s30, 7
      %p125 = scmp.ne.s32.totalorder %s120, %s122
      %p126 = scmp.eq.s32.totalorder %s30, 0
      %p127 = por %p125, %p126
      %p128 = scmp.ne.s32.totalorder %s120, %s122
      %p129 = scmp.eq.s32.totalorder %s35, 7
      %p130 = por %p128, %p129
      %p131 = scmp.ne.s32.totalorder %s122, %s123
      %p132 = scmp.eq.s32.totalorder %s35, 0
      %p133 = por %p131, %p132
      %p134 = scmp.ne.s32.totalorder %s122, %s123
      %p135 = scmp.eq.s32.totalorder %s36, 7
      %p136 = por %p134, %p135
      %p138 = scmp.ne.s32.totalorder %s123, %s137
      %p139 = scmp.eq.s32.totalorder %s36, 0
      %p140 = por %p138, %p139
      %s142 = sadd.s32 %s141, 1
      %p145 = scmp.eq.s32.totalorder %s30, 7
      %p146 = scmp.ne.s32.totalorder %s141, %s143
      %p147 = scmp.eq.s32.totalorder %s30, 0
      %p148 = por %p146, %p147
      %p149 = scmp.ne.s32.totalorder %s141, %s143
      %p150 = scmp.eq.s32.totalorder %s35, 7
      %p151 = por %p149, %p150
      %p152 = scmp.ne.s32.totalorder %s143, %s144
      %p153 = scmp.eq.s32.totalorder %s35, 0
      %p154 = por %p152, %p153
      %p155 = scmp.ne.s32.totalorder %s143, %s144
      %p156 = scmp.eq.s32.totalorder %s36, 7
      %p157 = por %p155, %p156
      %p159 = scmp.ne.s32.totalorder %s144, %s158
      %p160 = scmp.eq.s32.totalorder %s36, 0
      %p161 = por %p159, %p160
      %s163 = sadd.s32 %s162, 1
      %p166 = scmp.eq.s32.totalorder %s30, 7
      %p167 = scmp.ne.s32.totalorder %s162, %s164
      %p168 = scmp.eq.s32.totalorder %s30, 0
      %p169 = por %p167, %p168
      %p170 = scmp.ne.s32.totalorder %s162, %s164
      %p171 = scmp.eq.s32.totalorder %s35, 7
      %p172 = por %p170, %p171
      %p173 = scmp.ne.s32.totalorder %s164, %s165
      %p174 = scmp.eq.s32.totalorder %s35, 0
      %p175 = por %p173, %p174
      %p176 = scmp.ne.s32.totalorder %s164, %s165
      %p177 = scmp.eq.s32.totalorder %s36, 7
      %p178 = por %p176, %p177
      %p180 = scmp.ne.s32.totalorder %s165, %s179
      %p181 = scmp.eq.s32.totalorder %s36, 0
      %p182 = por %p180, %p181
      %s184 = sadd.s32 %s183, 1
      %p187 = scmp.eq.s32.totalorder %s30, 7
      %p188 = scmp.ne.s32.totalorder %s183, %s185
      %p189 = scmp.eq.s32.totalorder %s30, 0
      %p190 = por %p188, %p189
      %p191 = scmp.ne.s32.totalorder %s183, %s185
      %p192 = scmp.eq.s32.totalorder %s35, 7
      %p193 = por %p191, %p192
      %p194 = scmp.ne.s32.totalorder %s185, %s186
      %p195 = scmp.eq.s32.totalorder %s35, 0
      %p196 = por %p194, %p195
      %p197 = scmp.ne.s32.totalorder %s185, %s186
      %p198 = scmp.eq.s32.totalorder %s36, 7
      %p199 = por %p197, %p198
      %p201 = scmp.ne.s32.totalorder %s186, %s200
      %p202 = scmp.eq.s32.totalorder %s36, 0
      %p203 = por %p201, %p202
      %s205 = sadd.s32 %s204, 1
      %p208 = scmp.eq.s32.totalorder %s30, 7
      %p209 = scmp.ne.s32.totalorder %s204, %s206
      %p210 = scmp.eq.s32.totalorder %s30, 0
      %p211 = por %p209, %p210
      %p212 = scmp.ne.s32.totalorder %s204, %s206
      %p213 = scmp.eq.s32.totalorder %s35, 7
      %p214 = por %p212, %p213
      %p215 = scmp.ne.s32.totalorder %s206, %s207
      %p216 = scmp.eq.s32.totalorder %s35, 0
      %p217 = por %p215, %p216
      %p218 = scmp.ne.s32.totalorder %s206, %s207
      %p219 = scmp.eq.s32.totalorder %s36, 7
      %p220 = por %p218, %p219
      %p222 = scmp.ne.s32.totalorder %s207, %s221
      %p223 = scmp.eq.s32.totalorder %s36, 0
      %p224 = por %p222, %p223
      %s226 = sadd.s32 %s225, 1
      %p229 = scmp.eq.s32.totalorder %s30, 7
      %p230 = scmp.ne.s32.totalorder %s225, %s227
      %p231 = scmp.eq.s32.totalorder %s30, 0
      %p232 = por %p230, %p231
      %p233 = scmp.ne.s32.totalorder %s225, %s227
      %p234 = scmp.eq.s32.totalorder %s35, 7
      %p235 = por %p233, %p234
      %p236 = scmp.ne.s32.totalorder %s227, %s228
      %p237 = scmp.eq.s32.totalorder %s35, 0
      %p238 = por %p236, %p237
      %p239 = scmp.ne.s32.totalorder %s227, %s228
      %p240 = scmp.eq.s32.totalorder %s36, 7
      %p241 = por %p239, %p240
      %p243 = scmp.ne.s32.totalorder %s228, %s242
      %p244 = scmp.eq.s32.totalorder %s36, 0
      %p245 = por %p243, %p244
      %s247 = sadd.s32 %s246, 1
      %p250 = scmp.eq.s32.totalorder %s30, 7
      %p251 = scmp.ne.s32.totalorder %s246, %s248
      %p252 = scmp.eq.s32.totalorder %s30, 0
      %p253 = por %p251, %p252
      %p254 = scmp.ne.s32.totalorder %s246, %s248
      %p255 = scmp.eq.s32.totalorder %s35, 7
      %p256 = por %p254, %p255
      %p257 = scmp.ne.s32.totalorder %s248, %s249
      %p258 = scmp.eq.s32.totalorder %s35, 0
      %p259 = por %p257, %p258
      %p260 = scmp.ne.s32.totalorder %s248, %s249
      %p261 = scmp.eq.s32.totalorder %s36, 7
      %p262 = por %p260, %p261
      %p264 = scmp.ne.s32.totalorder %s249, %s263
      %p265 = scmp.eq.s32.totalorder %s36, 0
      %p266 = por %p264, %p265
      %s268 = sadd.s32 %s267, 1
      %p271 = scmp.eq.s32.totalorder %s30, 7
      %p272 = scmp.ne.s32.totalorder %s267, %s269
      %p273 = scmp.eq.s32.totalorder %s30, 0
      %p274 = por %p272, %p273
      %p275 = scmp.ne.s32.totalorder %s267, %s269
      %p276 = scmp.eq.s32.totalorder %s35, 7
      %p277 = por %p275, %p276
      %p278 = scmp.ne.s32.totalorder %s269, %s270
      %p279 = scmp.eq.s32.totalorder %s35, 0
      %p280 = por %p278, %p279
      %p281 = scmp.ne.s32.totalorder %s269, %s270
      %p282 = scmp.eq.s32.totalorder %s36, 7
      %p283 = por %p281, %p282
      %p285 = scmp.ne.s32.totalorder %s270, %s284
      %p286 = scmp.eq.s32.totalorder %s36, 0
      %p287 = por %p285, %p286
      %s289 = sadd.s32 %s288, 1
      %p292 = scmp.eq.s32.totalorder %s30, 7
      %p293 = scmp.ne.s32.totalorder %s288, %s290
      %p294 = scmp.eq.s32.totalorder %s30, 0
      %p295 = por %p293, %p294
      %p296 = scmp.ne.s32.totalorder %s288, %s290
      %p297 = scmp.eq.s32.totalorder %s35, 7
      %p298 = por %p296, %p297
      %p299 = scmp.ne.s32.totalorder %s290, %s291
      %p300 = scmp.eq.s32.totalorder %s35, 0
      %p301 = por %p299, %p300
      %p302 = scmp.ne.s32.totalorder %s290, %s291
      %p303 = scmp.eq.s32.totalorder %s36, 7
      %p304 = por %p302, %p303
      %p306 = scmp.ne.s32.totalorder %s291, %s305
      %p307 = scmp.eq.s32.totalorder %s36, 0
      %p308 = por %p306, %p307
      %s310 = sadd.s32 %s309, 1
      %p313 = scmp.eq.s32.totalorder %s30, 7
      %p314 = scmp.ne.s32.totalorder %s309, %s311
      %p315 = scmp.eq.s32.totalorder %s30, 0
      %p316 = por %p314, %p315
      %p317 = scmp.ne.s32.totalorder %s309, %s311
      %p318 = scmp.eq.s32.totalorder %s35, 7
      %p319 = por %p317, %p318
      %p320 = scmp.ne.s32.totalorder %s311, %s312
      %p321 = scmp.eq.s32.totalorder %s35, 0
      %p322 = por %p320, %p321
      %p323 = scmp.ne.s32.totalorder %s311, %s312
      %p324 = scmp.eq.s32.totalorder %s36, 7
      %p325 = por %p323, %p324
      %p327 = scmp.ne.s32.totalorder %s312, %s326
      %p328 = scmp.eq.s32.totalorder %s36, 0
      %p329 = por %p327, %p328
      %s331 = sadd.s32 %s330, 1
      %p334 = scmp.eq.s32.totalorder %s30, 7
      %p335 = scmp.ne.s32.totalorder %s330, %s332
      %p336 = scmp.eq.s32.totalorder %s30, 0
      %p337 = por %p335, %p336
      %p338 = scmp.ne.s32.totalorder %s330, %s332
      %p339 = scmp.eq.s32.totalorder %s35, 7
      %p340 = por %p338, %p339
      %p341 = scmp.ne.s32.totalorder %s332, %s333
      %p342 = scmp.eq.s32.totalorder %s35, 0
      %p343 = por %p341, %p342
      %p344 = scmp.ne.s32.totalorder %s332, %s333
      %p345 = scmp.eq.s32.totalorder %s36, 7
      %p346 = por %p344, %p345
      %p348 = scmp.ne.s32.totalorder %s333, %s347
      %p349 = scmp.eq.s32.totalorder %s36, 0
      %p350 = por %p348, %p349
      %s352 = sadd.s32 %s351, 1
      %p355 = scmp.eq.s32.totalorder %s30, 7
      %p356 = scmp.ne.s32.totalorder %s351, %s353
      %p357 = scmp.eq.s32.totalorder %s30, 0
      %p358 = por %p356, %p357
      %p359 = scmp.ne.s32.totalorder %s351, %s353
      %p360 = scmp.eq.s32.totalorder %s35, 7
      %p361 = por %p359, %p360
      %p362 = scmp.ne.s32.totalorder %s353, %s354
      %p363 = scmp.eq.s32.totalorder %s35, 0
      %p364 = por %p362, %p363
      %p365 = scmp.ne.s32.totalorder %s353, %s354
      %p366 = scmp.eq.s32.totalorder %s36, 7
      %p367 = por %p365, %p366
      %p369 = scmp.ne.s32.totalorder %s354, %s368
      %p370 = scmp.eq.s32.totalorder %s36, 0
      %p371 = por %p369, %p370
      %s373 = sadd.s32 %s372, 1
      %p376 = scmp.eq.s32.totalorder %s30, 7
      %p377 = scmp.ne.s32.totalorder %s372, %s374
      %p378 = scmp.eq.s32.totalorder %s30, 0
      %p379 = por %p377, %p378
      %p380 = scmp.ne.s32.totalorder %s372, %s374
      %p381 = scmp.eq.s32.totalorder %s35, 7
      %p382 = por %p380, %p381
      %p383 = scmp.ne.s32.totalorder %s374, %s375
      %p384 = scmp.eq.s32.totalorder %s35, 0
      %p385 = por %p383, %p384
      %p386 = scmp.ne.s32.totalorder %s374, %s375
      %p387 = scmp.eq.s32.totalorder %s36, 7
      %p388 = por %p386, %p387
      %p390 = scmp.ne.s32.totalorder %s375, %s389
      %p391 = scmp.eq.s32.totalorder %s36, 0
      %p392 = por %p390, %p391
      %s394 = sadd.s32 %s393, 1
      %p397 = scmp.eq.s32.totalorder %s30, 7
      %p398 = scmp.ne.s32.totalorder %s393, %s395
      %p399 = scmp.eq.s32.totalorder %s30, 0
      %p400 = por %p398, %p399
      %p401 = scmp.ne.s32.totalorder %s393, %s395
      %p402 = scmp.eq.s32.totalorder %s35, 7
      %p403 = por %p401, %p402
      %p404 = scmp.ne.s32.totalorder %s395, %s396
      %p405 = scmp.eq.s32.totalorder %s35, 0
      %p406 = por %p404, %p405
      %p407 = scmp.ne.s32.totalorder %s395, %s396
      %p408 = scmp.eq.s32.totalorder %s36, 7
      %p409 = por %p407, %p408
      %p411 = scmp.ne.s32.totalorder %s396, %s410
      %p412 = scmp.eq.s32.totalorder %s36, 0
      %p413 = por %p411, %p412
      %s415 = sadd.s32 %s414, 1
      %p418 = scmp.eq.s32.totalorder %s30, 7
      %p419 = scmp.ne.s32.totalorder %s414, %s416
      %p420 = scmp.eq.s32.totalorder %s30, 0
      %p421 = por %p419, %p420
      %p422 = scmp.ne.s32.totalorder %s414, %s416
      %p423 = scmp.eq.s32.totalorder %s35, 7
      %p424 = por %p422, %p423
      %p425 = scmp.ne.s32.totalorder %s416, %s417
      %p426 = scmp.eq.s32.totalorder %s35, 0
      %p427 = por %p425, %p426
      %p428 = scmp.ne.s32.totalorder %s416, %s417
      %p429 = scmp.eq.s32.totalorder %s36, 7
      %p430 = por %p428, %p429
      %p432 = scmp.ne.s32.totalorder %s417, %s431
      %p433 = scmp.eq.s32.totalorder %s36, 0
      %p434 = por %p432, %p433
      %s436 = sadd.s32 %s435, 1
      %p439 = scmp.eq.s32.totalorder %s30, 7
      %p440 = scmp.ne.s32.totalorder %s435, %s437
      %p441 = scmp.eq.s32.totalorder %s30, 0
      %p442 = por %p440, %p441
      %p443 = scmp.ne.s32.totalorder %s435, %s437
      %p444 = scmp.eq.s32.totalorder %s35, 7
      %p445 = por %p443, %p444
      %p446 = scmp.ne.s32.totalorder %s437, %s438
      %p447 = scmp.eq.s32.totalorder %s35, 0
      %p448 = por %p446, %p447
      %p449 = scmp.ne.s32.totalorder %s437, %s438
      %p450 = scmp.eq.s32.totalorder %s36, 7
      %p451 = por %p449, %p450
      %p453 = scmp.ne.s32.totalorder %s438, %s452
      %p454 = scmp.eq.s32.totalorder %s36, 0
      %p455 = por %p453, %p454
      %s457 = sadd.s32 %s456, 1
      %p460 = scmp.eq.s32.totalorder %s30, 7
      %p461 = scmp.ne.s32.totalorder %s456, %s458
      %p462 = scmp.eq.s32.totalorder %s30, 0
      %p463 = por %p461, %p462
      %p464 = scmp.ne.s32.totalorder %s456, %s458
      %p465 = scmp.eq.s32.totalorder %s35, 7
      %p466 = por %p464, %p465
      %p467 = scmp.ne.s32.totalorder %s458, %s459
      %p468 = scmp.eq.s32.totalorder %s35, 0
      %p469 = por %p467, %p468
      %p470 = scmp.ne.s32.totalorder %s458, %s459
      %p471 = scmp.eq.s32.totalorder %s36, 7
      %p472 = por %p470, %p471
      %p474 = scmp.ne.s32.totalorder %s459, %s473
      %p475 = scmp.eq.s32.totalorder %s36, 0
      %p476 = por %p474, %p475
      %s478 = sadd.s32 %s477, 1
      %p481 = scmp.eq.s32.totalorder %s30, 7
      %p482 = scmp.ne.s32.totalorder %s477, %s479
      %p483 = scmp.eq.s32.totalorder %s30, 0
      %p484 = por %p482, %p483
      %p485 = scmp.ne.s32.totalorder %s477, %s479
      %p486 = scmp.eq.s32.totalorder %s35, 7
      %p487 = por %p485, %p486
      %p488 = scmp.ne.s32.totalorder %s479, %s480
      %p489 = scmp.eq.s32.totalorder %s35, 0
      %p490 = por %p488, %p489
      %p491 = scmp.ne.s32.totalorder %s479, %s480
      %p492 = scmp.eq.s32.totalorder %s36, 7
      %p493 = por %p491, %p492
      %p495 = scmp.ne.s32.totalorder %s480, %s494
      %p496 = scmp.eq.s32.totalorder %s36, 0
      %p497 = por %p495, %p496
      %s498 = ssub.s32 %s37, %s49
      %p499 = scmp.eq.s32.totalorder %s498, 0
      %s501 = sadd.s32 %s500, 1
      %s502 = scalar_select %p499, %s500, %s501
      %p505 = pneg %p499
      %p506 = scmp.eq.s32.totalorder %s30, 7
      %p507 = por %p505, %p506
      %p508 = scmp.ne.s32.totalorder %s500, %s503
      %p509 = scmp.eq.s32.totalorder %s30, 0
      %p510 = por %p508, %p509
      %p511 = scmp.ne.s32.totalorder %s500, %s503
      %p512 = scmp.eq.s32.totalorder %s35, 7
      %p513 = por %p511, %p512
      %p514 = scmp.ne.s32.totalorder %s503, %s504
      %p515 = scmp.eq.s32.totalorder %s35, 0
      %p516 = por %p514, %p515
      %p517 = scmp.ne.s32.totalorder %s503, %s504
      %p518 = scmp.eq.s32.totalorder %s36, 7
      %p519 = por %p517, %p518
      %p521 = scmp.ne.s32.totalorder %s504, %s520
      %p522 = scmp.eq.s32.totalorder %s36, 0
      %p523 = por %p521, %p522
      %p524 = scmp.le.s32.totalorder 1, %s30
      %p525 = scmp.lt.s32.totalorder %s30, 9
      %p526 = pnand %p524, %p525
      %p527 = pneg %p526
      // Predicated region
      $region9: #{tpu_custom_call.1} parent=5 // pred_check
        _
      $region10: #{tpu_custom_call.1} parent=5 // pred_check_branch
        %529 = sbr.rel (%p526) target = $region12
      $region11: #{tpu_custom_call.1} parent=5 // pred_region
        %s530 = ssub.s32 %s30, 1
        // Predicated region
        $region13: #{tpu_custom_call.1} parent=11 // pred_check
          %p531 = pneg %p91
        $region14: #{tpu_custom_call.1} parent=11 // pred_check_branch
          %533 = sbr.rel (%p531) target = $region16
        $region15: #{tpu_custom_call.1} parent=11 // pred_region
          _
        $region16: #{tpu_custom_call.1} parent=11 // pred_fallthru
          _
        // Predicated region
        $region17: #{tpu_custom_call.1} parent=11 // pred_check
          %p534 = pneg %p112
        $region18: #{tpu_custom_call.1} parent=11 // pred_check_branch
          %536 = sbr.rel (%p534) target = $region20
        $region19: #{tpu_custom_call.1} parent=11 // pred_region
          _
        $region20: #{tpu_custom_call.1} parent=11 // pred_fallthru
          _
        // Predicated region
        $region21: #{tpu_custom_call.1} parent=11 // pred_check
          %p537 = pneg %p133
        $region22: #{tpu_custom_call.1} parent=11 // pred_check_branch
          %539 = sbr.rel (%p537) target = $region24
        $region23: #{tpu_custom_call.1} parent=11 // pred_region
          _
        $region24: #{tpu_custom_call.1} parent=11 // pred_fallthru
          _
        // Predicated region
        $region25: #{tpu_custom_call.1} parent=11 // pred_check
          %p540 = pneg %p154
        $region26: #{tpu_custom_call.1} parent=11 // pred_check_branch
          %542 = sbr.rel (%p540) target = $region28
        $region27: #{tpu_custom_call.1} parent=11 // pred_region
          _
        $region28: #{tpu_custom_call.1} parent=11 // pred_fallthru
          _
        // Predicated region
        $region29: #{tpu_custom_call.1} parent=11 // pred_check
          %p543 = pneg %p175
        $region30: #{tpu_custom_call.1} parent=11 // pred_check_branch
          %545 = sbr.rel (%p543) target = $region32
        $region31: #{tpu_custom_call.1} parent=11 // pred_region
          _
        $region32: #{tpu_custom_call.1} parent=11 // pred_fallthru
          _
        // Predicated region
        $region33: #{tpu_custom_call.1} parent=11 // pred_check
          %p546 = pneg %p196
        $region34: #{tpu_custom_call.1} parent=11 // pred_check_branch
          %548 = sbr.rel (%p546) target = $region36
        $region35: #{tpu_custom_call.1} parent=11 // pred_region
          _
        $region36: #{tpu_custom_call.1} parent=11 // pred_fallthru
          _
        // Predicated region
        $region37: #{tpu_custom_call.1} parent=11 // pred_check
          %p549 = pneg %p217
        $region38: #{tpu_custom_call.1} parent=11 // pred_check_branch
          %551 = sbr.rel (%p549) target = $region40
        $region39: #{tpu_custom_call.1} parent=11 // pred_region
          _
        $region40: #{tpu_custom_call.1} parent=11 // pred_fallthru
          _
        // Predicated region
        $region41: #{tpu_custom_call.1} parent=11 // pred_check
          %p552 = pneg %p238
        $region42: #{tpu_custom_call.1} parent=11 // pred_check_branch
          %554 = sbr.rel (%p552) target = $region44
        $region43: #{tpu_custom_call.1} parent=11 // pred_region
          _
        $region44: #{tpu_custom_call.1} parent=11 // pred_fallthru
          _
        // Predicated region
        $region45: #{tpu_custom_call.1} parent=11 // pred_check
          %p555 = pneg %p259
        $region46: #{tpu_custom_call.1} parent=11 // pred_check_branch
          %557 = sbr.rel (%p555) target = $region48
        $region47: #{tpu_custom_call.1} parent=11 // pred_region
          _
        $region48: #{tpu_custom_call.1} parent=11 // pred_fallthru
          _
        // Predicated region
        $region49: #{tpu_custom_call.1} parent=11 // pred_check
          %p558 = pneg %p280
        $region50: #{tpu_custom_call.1} parent=11 // pred_check_branch
          %560 = sbr.rel (%p558) target = $region52
        $region51: #{tpu_custom_call.1} parent=11 // pred_region
          _
        $region52: #{tpu_custom_call.1} parent=11 // pred_fallthru
          _
        // Predicated region
        $region53: #{tpu_custom_call.1} parent=11 // pred_check
          %p561 = pneg %p301
        $region54: #{tpu_custom_call.1} parent=11 // pred_check_branch
          %563 = sbr.rel (%p561) target = $region56
        $region55: #{tpu_custom_call.1} parent=11 // pred_region
          _
        $region56: #{tpu_custom_call.1} parent=11 // pred_fallthru
          _
        // Predicated region
        $region57: #{tpu_custom_call.1} parent=11 // pred_check
          %p564 = pneg %p322
        $region58: #{tpu_custom_call.1} parent=11 // pred_check_branch
          %566 = sbr.rel (%p564) target = $region60
        $region59: #{tpu_custom_call.1} parent=11 // pred_region
          _
        $region60: #{tpu_custom_call.1} parent=11 // pred_fallthru
          _
        // Predicated region
        $region61: #{tpu_custom_call.1} parent=11 // pred_check
          %p567 = pneg %p343
        $region62: #{tpu_custom_call.1} parent=11 // pred_check_branch
          %569 = sbr.rel (%p567) target = $region64
        $region63: #{tpu_custom_call.1} parent=11 // pred_region
          _
        $region64: #{tpu_custom_call.1} parent=11 // pred_fallthru
          _
        // Predicated region
        $region65: #{tpu_custom_call.1} parent=11 // pred_check
          %p570 = pneg %p364
        $region66: #{tpu_custom_call.1} parent=11 // pred_check_branch
          %572 = sbr.rel (%p570) target = $region68
        $region67: #{tpu_custom_call.1} parent=11 // pred_region
          _
        $region68: #{tpu_custom_call.1} parent=11 // pred_fallthru
          _
        // Predicated region
        $region69: #{tpu_custom_call.1} parent=11 // pred_check
          %p573 = pneg %p385
        $region70: #{tpu_custom_call.1} parent=11 // pred_check_branch
          %575 = sbr.rel (%p573) target = $region72
        $region71: #{tpu_custom_call.1} parent=11 // pred_region
          _
        $region72: #{tpu_custom_call.1} parent=11 // pred_fallthru
          _
        // Predicated region
        $region73: #{tpu_custom_call.1} parent=11 // pred_check
          %p576 = pneg %p406
        $region74: #{tpu_custom_call.1} parent=11 // pred_check_branch
          %578 = sbr.rel (%p576) target = $region76
        $region75: #{tpu_custom_call.1} parent=11 // pred_region
          _
        $region76: #{tpu_custom_call.1} parent=11 // pred_fallthru
          _
        // Predicated region
        $region77: #{tpu_custom_call.1} parent=11 // pred_check
          %p579 = pneg %p427
        $region78: #{tpu_custom_call.1} parent=11 // pred_check_branch
          %581 = sbr.rel (%p579) target = $region80
        $region79: #{tpu_custom_call.1} parent=11 // pred_region
          _
        $region80: #{tpu_custom_call.1} parent=11 // pred_fallthru
          _
        // Predicated region
        $region81: #{tpu_custom_call.1} parent=11 // pred_check
          %p582 = pneg %p448
        $region82: #{tpu_custom_call.1} parent=11 // pred_check_branch
          %584 = sbr.rel (%p582) target = $region84
        $region83: #{tpu_custom_call.1} parent=11 // pred_region
          _
        $region84: #{tpu_custom_call.1} parent=11 // pred_fallthru
          _
        // Predicated region
        $region85: #{tpu_custom_call.1} parent=11 // pred_check
          %p585 = pneg %p469
        $region86: #{tpu_custom_call.1} parent=11 // pred_check_branch
          %587 = sbr.rel (%p585) target = $region88
        $region87: #{tpu_custom_call.1} parent=11 // pred_region
          _
        $region88: #{tpu_custom_call.1} parent=11 // pred_fallthru
          _
        // Predicated region
        $region89: #{tpu_custom_call.1} parent=11 // pred_check
          %p588 = pneg %p490
        $region90: #{tpu_custom_call.1} parent=11 // pred_check_branch
          %590 = sbr.rel (%p588) target = $region92
        $region91: #{tpu_custom_call.1} parent=11 // pred_region
          _
        $region92: #{tpu_custom_call.1} parent=11 // pred_fallthru
          _
      $region12: #{tpu_custom_call.1} parent=5 // pred_fallthru
        _
      %p591 = scmp.lt.s32.totalorder %s30, 8
      // Predicated region
      $region93: #{tpu_custom_call.1} parent=5 // pred_check
        %p592 = pneg %p591
      $region94: #{tpu_custom_call.1} parent=5 // pred_check_branch
        %594 = sbr.rel (%p592) target = $region96
      $region95: #{tpu_custom_call.1} parent=5 // pred_region
        // Predicated region
        $region97: #{tpu_custom_call.1} parent=95 // pred_check
          %p595 = pneg %p64
        $region98: #{tpu_custom_call.1} parent=95 // pred_check_branch
          %597 = sbr.rel (%p595) target = $region100
        $region99: #{tpu_custom_call.1} parent=95 // pred_region
          %s598 = smul.u32 16, %s38
          %p599 = scmp.lt.s32.totalorder %s37, 3
          %s600 = scalar_select %p599, %s37, 3
          %p601 = scmp.lt.s32.totalorder %s598, 31
          %s602 = scalar_select %p601, %s598, 31
          %s603 = smul.addr %s600, 32
          %s604 = sadd.s32 %s602, %s603
          %s605 = smul.addr %s604, 8
          %s606 = scalar_lea.vmem %s0, %s605
          %s607 = smul.u32 16, %s38
        $region100: #{tpu_custom_call.1} parent=95 // pred_fallthru
          _
      $region96: #{tpu_custom_call.1} parent=5 // pred_fallthru
        _
      %p608 = scmp.le.s32.totalorder 1, %s30
      %p609 = scmp.lt.s32.totalorder %s30, 9
      %p610 = pnand %p608, %p609
      %p611 = pneg %p610
      // Predicated region
      $region101: #{tpu_custom_call.1} parent=5 // pred_check
        _
      $region102: #{tpu_custom_call.1} parent=5 // pred_check_branch
        %613 = sbr.rel (%p610) target = $region104
      $region103: #{tpu_custom_call.1} parent=5 // pred_region
        %s614 = ssub.s32 %s30, 1
        %s615 = smul.u32 16, %s40
        %p616 = scmp.lt.s32.totalorder %s39, 3
        %s617 = scalar_select %p616, %s39, 3
        %p618 = scmp.lt.s32.totalorder %s615, 31
        %s619 = scalar_select %p618, %s615, 31
        %s620 = smul.addr %s617, 32
        %s621 = sadd.s32 %s619, %s620
        %s622 = smul.addr %s621, 8
        %s623 = scalar_lea.vmem %s0, %s622
        %p624 = pneg %p70
        %p625 = pneg %p67
        %p626 = pneg %p91
        %p627 = pneg %p88
        %p628 = pneg %p112
        %p629 = pneg %p109
        %p630 = pneg %p133
        %p631 = pneg %p130
        %p632 = pneg %p154
        %p633 = pneg %p151
        %p634 = pneg %p175
        %p635 = pneg %p172
        %p636 = pneg %p196
        %p637 = pneg %p193
        %p638 = pneg %p217
        %p639 = pneg %p214
        %p640 = pneg %p238
        %p641 = pneg %p235
        %p642 = pneg %p259
        %p643 = pneg %p256
        %p644 = pneg %p280
        %p645 = pneg %p277
        %p646 = pneg %p301
        %p647 = pneg %p298
        %p648 = pneg %p322
        %p649 = pneg %p319
        %p650 = pneg %p343
        %p651 = pneg %p340
        %p652 = pneg %p364
        %p653 = pneg %p361
        %p654 = pneg %p385
        %p655 = pneg %p382
        %p656 = pneg %p406
        %p657 = pneg %p403
        %p658 = pneg %p427
        %p659 = pneg %p424
        %p660 = pneg %p448
        %p661 = pneg %p445
        %p662 = pneg %p469
        %p663 = pneg %p466
        %p664 = pneg %p490
        %p665 = pneg %p487
        %p666 = pneg %p516
        %p667 = pneg %p513
        %s668 = sand.u32 %s503, 1
        %s669 = scalar_lea.sflag [#allocation4], %s668
        %s670 = sand.u32 %s503, 1
        %s671 = scalar_lea.vmem [#allocation3], %s670
        %s672 = smul.u32 16, %s40
        %p673 = scmp.lt.s32.totalorder %s39, 3
        %s674 = scalar_select %p673, %s39, 3
        %p675 = scmp.lt.s32.totalorder %s672, 31
        %s676 = scalar_select %p675, %s672, 31
        %s677 = smul.addr %s674, 32
        %s678 = sadd.s32 %s676, %s677
        %s679 = smul.addr %s678, 8
        %s680 = scalar_lea.vmem %s0, %s679
        %s681 = smul.u32 16, %s40
        %p683 = scmp.eq.s32.totalorder %s40, 0
        // Predicated region
        $region105: #{tpu_custom_call.1} parent=103 // pred_check
          %p684 = pneg %p683
        $region106: #{tpu_custom_call.1} parent=103 // pred_check_branch
          %686 = sbr.rel (%p684) target = $region108
        $region107: #{tpu_custom_call.1} parent=103 // pred_region
          %vm687 = vcmask 516096
          %688 = vst.msk [vmem:[#allocation2] sm:$0x1] %vm687, -inf
        $region108: #{tpu_custom_call.1} parent=103 // pred_fallthru
          _
        %v689 = vld [vmem:[%s680] sm:$0xff]
        %v690 = vld [vmem:[%s680 + $0x8] sm:$0xff]
        %v691 = vld [vmem:[%s680 + $0x10] sm:$0xff]
        %v692 = vld [vmem:[%s680 + $0x18] sm:$0xff]
        %v693 = vld [vmem:[%s680 + $0x20] sm:$0xff]
        %v694 = vld [vmem:[%s680 + $0x28] sm:$0xff]
        %v695 = vld [vmem:[%s680 + $0x30] sm:$0xff]
        %v696 = vld [vmem:[%s680 + $0x38] sm:$0xff]
        %v697 = vld [vmem:[%s680 + $0x40] sm:$0xff]
        %v698 = vld [vmem:[%s680 + $0x48] sm:$0xff]
        %v699 = vld [vmem:[%s680 + $0x50] sm:$0xff]
        %v700 = vld [vmem:[%s680 + $0x58] sm:$0xff]
        %v701 = vld [vmem:[%s680 + $0x60] sm:$0xff]
        %v702 = vld [vmem:[%s680 + $0x68] sm:$0xff]
        %v703 = vld [vmem:[%s680 + $0x70] sm:$0xff]
        %v704 = vld [vmem:[%s680 + $0x78] sm:$0xff]
        %v705 = vld [vmem:[%s1] sm:$0x1]
        %707 = vset.pattern.permute.xlu0 0
        %708 = vperm.xlu0 %707, %v689
        %v709 = vpop.permute.xlu0 %708
        %712 = vset.pattern.permute.xlu0 0
        %713 = vperm.xlu0 %712, %v690
        %v714 = vpop.permute.xlu0 %713
        %717 = vset.pattern.permute.xlu0 0
        %718 = vperm.xlu0 %717, %v691
        %v719 = vpop.permute.xlu0 %718
        %722 = vset.pattern.permute.xlu0 0
        %723 = vperm.xlu0 %722, %v692
        %v724 = vpop.permute.xlu0 %723
        %727 = vset.pattern.permute.xlu0 0
        %728 = vperm.xlu0 %727, %v693
        %v729 = vpop.permute.xlu0 %728
        %732 = vset.pattern.permute.xlu0 0
        %733 = vperm.xlu0 %732, %v694
        %v734 = vpop.permute.xlu0 %733
        %737 = vset.pattern.permute.xlu0 0
        %738 = vperm.xlu0 %737, %v695
        %v739 = vpop.permute.xlu0 %738
        %742 = vset.pattern.permute.xlu0 0
        %743 = vperm.xlu0 %742, %v696
        %v744 = vpop.permute.xlu0 %743
        %747 = vset.pattern.permute.xlu0 0
        %748 = vperm.xlu0 %747, %v697
        %v749 = vpop.permute.xlu0 %748
        %752 = vset.pattern.permute.xlu0 0
        %753 = vperm.xlu0 %752, %v698
        %v754 = vpop.permute.xlu0 %753
        %757 = vset.pattern.permute.xlu0 0
        %758 = vperm.xlu0 %757, %v699
        %v759 = vpop.permute.xlu0 %758
        %762 = vset.pattern.permute.xlu0 0
        %763 = vperm.xlu0 %762, %v700
        %v764 = vpop.permute.xlu0 %763
        %767 = vset.pattern.permute.xlu0 0
        %768 = vperm.xlu0 %767, %v701
        %v769 = vpop.permute.xlu0 %768
        %772 = vset.pattern.permute.xlu0 0
        %773 = vperm.xlu0 %772, %v702
        %v774 = vpop.permute.xlu0 %773
        %777 = vset.pattern.permute.xlu0 0
        %778 = vperm.xlu0 %777, %v703
        %v779 = vpop.permute.xlu0 %778
        %782 = vset.pattern.permute.xlu0 0
        %783 = vperm.xlu0 %782, %v704
        %v784 = vpop.permute.xlu0 %783
        %v786 = vlaneseq
        %v787 = vshrl.u32 %v786, 7
        %v788 = vsub.s32 0, %v787
        %v789 = vrot.slane %v705, %v788
        %v790 = vmul.f32 %v709, %v789
        %v791 = vmul.f32 %v714, %v789
        %v792 = vmul.f32 %v719, %v789
        %v793 = vmul.f32 %v724, %v789
        %v794 = vmul.f32 %v729, %v789
        %v795 = vmul.f32 %v734, %v789
        %v796 = vmul.f32 %v739, %v789
        %v797 = vmul.f32 %v744, %v789
        %v798 = vmul.f32 %v749, %v789
        %v799 = vmul.f32 %v754, %v789
        %v800 = vmul.f32 %v759, %v789
        %v801 = vmul.f32 %v764, %v789
        %v802 = vmul.f32 %v769, %v789
        %v803 = vmul.f32 %v774, %v789
        %v804 = vmul.f32 %v779, %v789
        %v805 = vmul.f32 %v784, %v789
        %v806 = vld [vmem:[%s1 + $0x1] sm:$0x1]
        %807 = vset.pattern.permute.xlu0 1
        %808 = vperm.xlu0 %807, %v689
        %v809 = vpop.permute.xlu0 %808
        %811 = vset.pattern.permute.xlu0 1
        %812 = vperm.xlu0 %811, %v690
        %v813 = vpop.permute.xlu0 %812
        %815 = vset.pattern.permute.xlu0 1
        %816 = vperm.xlu0 %815, %v691
        %v817 = vpop.permute.xlu0 %816
        %819 = vset.pattern.permute.xlu0 1
        %820 = vperm.xlu0 %819, %v692
        %v821 = vpop.permute.xlu0 %820
        %823 = vset.pattern.permute.xlu0 1
        %824 = vperm.xlu0 %823, %v693
        %v825 = vpop.permute.xlu0 %824
        %827 = vset.pattern.permute.xlu0 1
        %828 = vperm.xlu0 %827, %v694
        %v829 = vpop.permute.xlu0 %828
        %831 = vset.pattern.permute.xlu0 1
        %832 = vperm.xlu0 %831, %v695
        %v833 = vpop.permute.xlu0 %832
        %835 = vset.pattern.permute.xlu0 1
        %836 = vperm.xlu0 %835, %v696
        %v837 = vpop.permute.xlu0 %836
        %839 = vset.pattern.permute.xlu0 1
        %840 = vperm.xlu0 %839, %v697
        %v841 = vpop.permute.xlu0 %840
        %843 = vset.pattern.permute.xlu0 1
        %844 = vperm.xlu0 %843, %v698
        %v845 = vpop.permute.xlu0 %844
        %847 = vset.pattern.permute.xlu0 1
        %848 = vperm.xlu0 %847, %v699
        %v849 = vpop.permute.xlu0 %848
        %851 = vset.pattern.permute.xlu0 1
        %852 = vperm.xlu0 %851, %v700
        %v853 = vpop.permute.xlu0 %852
        %855 = vset.pattern.permute.xlu0 1
        %856 = vperm.xlu0 %855, %v701
        %v857 = vpop.permute.xlu0 %856
        %859 = vset.pattern.permute.xlu0 1
        %860 = vperm.xlu0 %859, %v702
        %v861 = vpop.permute.xlu0 %860
        %863 = vset.pattern.permute.xlu0 1
        %864 = vperm.xlu0 %863, %v703
        %v865 = vpop.permute.xlu0 %864
        %867 = vset.pattern.permute.xlu0 1
        %868 = vperm.xlu0 %867, %v704
        %v869 = vpop.permute.xlu0 %868
        %v871 = vlaneseq
        %v872 = vshrl.u32 %v871, 7
        %v873 = vsub.s32 0, %v872
        %v874 = vrot.slane %v806, %v873
        %v875 = vmul.f32 %v809, %v874
        %v876 = vmul.f32 %v813, %v874
        %v877 = vmul.f32 %v817, %v874
        %v878 = vmul.f32 %v821, %v874
        %v879 = vmul.f32 %v825, %v874
        %v880 = vmul.f32 %v829, %v874
        %v881 = vmul.f32 %v833, %v874
        %v882 = vmul.f32 %v837, %v874
        %v883 = vmul.f32 %v841, %v874
        %v884 = vmul.f32 %v845, %v874
        %v885 = vmul.f32 %v849, %v874
        %v886 = vmul.f32 %v853, %v874
        %v887 = vmul.f32 %v857, %v874
        %v888 = vmul.f32 %v861, %v874
        %v889 = vmul.f32 %v865, %v874
        %v890 = vmul.f32 %v869, %v874
        %v891 = vadd.f32 %v790, %v875
        %v892 = vadd.f32 %v791, %v876
        %v893 = vadd.f32 %v792, %v877
        %v894 = vadd.f32 %v793, %v878
        %v895 = vadd.f32 %v794, %v879
        %v896 = vadd.f32 %v795, %v880
        %v897 = vadd.f32 %v796, %v881
        %v898 = vadd.f32 %v797, %v882
        %v899 = vadd.f32 %v798, %v883
        %v900 = vadd.f32 %v799, %v884
        %v901 = vadd.f32 %v800, %v885
        %v902 = vadd.f32 %v801, %v886
        %v903 = vadd.f32 %v802, %v887
        %v904 = vadd.f32 %v803, %v888
        %v905 = vadd.f32 %v804, %v889
        %v906 = vadd.f32 %v805, %v890
        %v907 = vld [vmem:[%s1 + $0x2] sm:$0x1]
        %908 = vset.pattern.permute.xlu0 2
        %909 = vperm.xlu0 %908, %v689
        %v910 = vpop.permute.xlu0 %909
        %912 = vset.pattern.permute.xlu0 2
        %913 = vperm.xlu0 %912, %v690
        %v914 = vpop.permute.xlu0 %913
        %916 = vset.pattern.permute.xlu0 2
        %917 = vperm.xlu0 %916, %v691
        %v918 = vpop.permute.xlu0 %917
        %920 = vset.pattern.permute.xlu0 2
        %921 = vperm.xlu0 %920, %v692
        %v922 = vpop.permute.xlu0 %921
        %924 = vset.pattern.permute.xlu0 2
        %925 = vperm.xlu0 %924, %v693
        %v926 = vpop.permute.xlu0 %925
        %928 = vset.pattern.permute.xlu0 2
        %929 = vperm.xlu0 %928, %v694
        %v930 = vpop.permute.xlu0 %929
        %932 = vset.pattern.permute.xlu0 2
        %933 = vperm.xlu0 %932, %v695
        %v934 = vpop.permute.xlu0 %933
        %936 = vset.pattern.permute.xlu0 2
        %937 = vperm.xlu0 %936, %v696
        %v938 = vpop.permute.xlu0 %937
        %940 = vset.pattern.permute.xlu0 2
        %941 = vperm.xlu0 %940, %v697
        %v942 = vpop.permute.xlu0 %941
        %944 = vset.pattern.permute.xlu0 2
        %945 = vperm.xlu0 %944, %v698
        %v946 = vpop.permute.xlu0 %945
        %948 = vset.pattern.permute.xlu0 2
        %949 = vperm.xlu0 %948, %v699
        %v950 = vpop.permute.xlu0 %949
        %952 = vset.pattern.permute.xlu0 2
        %953 = vperm.xlu0 %952, %v700
        %v954 = vpop.permute.xlu0 %953
        %956 = vset.pattern.permute.xlu0 2
        %957 = vperm.xlu0 %956, %v701
        %v958 = vpop.permute.xlu0 %957
        %960 = vset.pattern.permute.xlu0 2
        %961 = vperm.xlu0 %960, %v702
        %v962 = vpop.permute.xlu0 %961
        %964 = vset.pattern.permute.xlu0 2
        %965 = vperm.xlu0 %964, %v703
        %v966 = vpop.permute.xlu0 %965
        %968 = vset.pattern.permute.xlu0 2
        %969 = vperm.xlu0 %968, %v704
        %v970 = vpop.permute.xlu0 %969
        %v972 = vlaneseq
        %v973 = vshrl.u32 %v972, 7
        %v974 = vsub.s32 0, %v973
        %v975 = vrot.slane %v907, %v974
        %v976 = vmul.f32 %v910, %v975
        %v977 = vmul.f32 %v914, %v975
        %v978 = vmul.f32 %v918, %v975
        %v979 = vmul.f32 %v922, %v975
        %v980 = vmul.f32 %v926, %v975
        %v981 = vmul.f32 %v930, %v975
        %v982 = vmul.f32 %v934, %v975
        %v983 = vmul.f32 %v938, %v975
        %v984 = vmul.f32 %v942, %v975
        %v985 = vmul.f32 %v946, %v975
        %v986 = vmul.f32 %v950, %v975
        %v987 = vmul.f32 %v954, %v975
        %v988 = vmul.f32 %v958, %v975
        %v989 = vmul.f32 %v962, %v975
        %v990 = vmul.f32 %v966, %v975
        %v991 = vmul.f32 %v970, %v975
        %v992 = vadd.f32 %v891, %v976
        %v993 = vadd.f32 %v892, %v977
        %v994 = vadd.f32 %v893, %v978
        %v995 = vadd.f32 %v894, %v979
        %v996 = vadd.f32 %v895, %v980
        %v997 = vadd.f32 %v896, %v981
        %v998 = vadd.f32 %v897, %v982
        %v999 = vadd.f32 %v898, %v983
        %v1000 = vadd.f32 %v899, %v984
        %v1001 = vadd.f32 %v900, %v985
        %v1002 = vadd.f32 %v901, %v986
        %v1003 = vadd.f32 %v902, %v987
        %v1004 = vadd.f32 %v903, %v988
        %v1005 = vadd.f32 %v904, %v989
        %v1006 = vadd.f32 %v905, %v990
        %v1007 = vadd.f32 %v906, %v991
        %v1008 = vld [vmem:[%s2] sm:$0x1]
        %v1010 = vlaneseq
        %v1011 = vshrl.u32 %v1010, 7
        %v1012 = vsub.s32 0, %v1011
        %v1013 = vrot.slane %v1008, %v1012
        %v1015 = vmul.f32 %v992, %v1013
        %v1016 = vmul.f32 %v993, %v1013
        %v1017 = vmul.f32 %v994, %v1013
        %v1018 = vmul.f32 %v995, %v1013
        %v1019 = vmul.f32 %v996, %v1013
        %v1020 = vmul.f32 %v997, %v1013
        %v1021 = vmul.f32 %v998, %v1013
        %v1022 = vmul.f32 %v999, %v1013
        %v1023 = vmul.f32 %v1000, %v1013
        %v1024 = vmul.f32 %v1001, %v1013
        %v1025 = vmul.f32 %v1002, %v1013
        %v1026 = vmul.f32 %v1003, %v1013
        %v1027 = vmul.f32 %v1004, %v1013
        %v1028 = vmul.f32 %v1005, %v1013
        %v1029 = vmul.f32 %v1006, %v1013
        %v1030 = vmul.f32 %v1007, %v1013
        %v1031 = vld [vmem:[%s3] sm:$0x1]
        %v1033 = vlaneseq
        %v1034 = vshrl.u32 %v1033, 7
        %v1035 = vsub.s32 0, %v1034
        %v1036 = vrot.slane %v1031, %v1035
        %v1038 = vadd.f32 %v1015, %v1036
        %v1039 = vadd.f32 %v1016, %v1036
        %v1040 = vadd.f32 %v1017, %v1036
        %v1041 = vadd.f32 %v1018, %v1036
        %v1042 = vadd.f32 %v1019, %v1036
        %v1043 = vadd.f32 %v1020, %v1036
        %v1044 = vadd.f32 %v1021, %v1036
        %v1045 = vadd.f32 %v1022, %v1036
        %v1046 = vadd.f32 %v1023, %v1036
        %v1047 = vadd.f32 %v1024, %v1036
        %v1048 = vadd.f32 %v1025, %v1036
        %v1049 = vadd.f32 %v1026, %v1036
        %v1050 = vadd.f32 %v1027, %v1036
        %v1051 = vadd.f32 %v1028, %v1036
        %v1052 = vadd.f32 %v1029, %v1036
        %v1053 = vadd.f32 %v1030, %v1036
        %v1054 = vmax.f32 %v1038, 0.0
        %v1055 = vmax.f32 %v1039, 0.0
        %v1056 = vmax.f32 %v1040, 0.0
        %v1057 = vmax.f32 %v1041, 0.0
        %v1058 = vmax.f32 %v1042, 0.0
        %v1059 = vmax.f32 %v1043, 0.0
        %v1060 = vmax.f32 %v1044, 0.0
        %v1061 = vmax.f32 %v1045, 0.0
        %v1062 = vmax.f32 %v1046, 0.0
        %v1063 = vmax.f32 %v1047, 0.0
        %v1064 = vmax.f32 %v1048, 0.0
        %v1065 = vmax.f32 %v1049, 0.0
        %v1066 = vmax.f32 %v1050, 0.0
        %v1067 = vmax.f32 %v1051, 0.0
        %v1068 = vmax.f32 %v1052, 0.0
        %v1069 = vmax.f32 %v1053, 0.0
        %v1070 = vpack.c.bf16 %v1055, %v1054
        %v1071 = vpack.c.bf16 %v1057, %v1056
        %v1072 = vpack.c.bf16 %v1059, %v1058
        %v1073 = vpack.c.bf16 %v1061, %v1060
        %v1074 = vpack.c.bf16 %v1063, %v1062
        %v1075 = vpack.c.bf16 %v1065, %v1064
        %v1076 = vpack.c.bf16 %v1067, %v1066
        %v1077 = vpack.c.bf16 %v1069, %v1068
        %v1078 = vld [vmem:[%s4] sm:$0xf]
        %v1079 = vld [vmem:[%s4 + $0x4] sm:$0xf]
        %v1080 = vld [vmem:[%s4 + $0x8] sm:$0xf]
        %v1081 = vld [vmem:[%s4 + $0xc] sm:$0xf]
        %v1082 = vld [vmem:[%s4 + $0x10] sm:$0xf]
        %v1083 = vld [vmem:[%s4 + $0x14] sm:$0xf]
        %v1084 = vld [vmem:[%s4 + $0x18] sm:$0xf]
        %v1085 = vld [vmem:[%s4 + $0x1c] sm:$0xf]
        %v1094 = vunpack.c.l.b16 %v1078
        %v1095 = vunpack.c.l.b16 %v1079
        %v1096 = vunpack.c.l.b16 %v1080
        %v1097 = vunpack.c.l.b16 %v1081
        %v1098 = vunpack.c.l.b16 %v1082
        %v1099 = vunpack.c.l.b16 %v1083
        %v1100 = vunpack.c.l.b16 %v1084
        %v1101 = vunpack.c.l.b16 %v1085
        %v1102 = vpack.c.b16 %v1095, %v1094
        %v1103 = vpack.c.b16 %v1097, %v1096
        %v1104 = vpack.c.b16 %v1099, %v1098
        %v1105 = vpack.c.b16 %v1101, %v1100
        %vm1110 = vcmask 523264
        %v1112 = vsel %vm1110, %v1070, 0
        %v1115 = vsel %vm1110, %v1071, 0
        %v1118 = vsel %vm1110, %v1072, 0
        %v1121 = vsel %vm1110, %v1073, 0
        %v1124 = vsel %vm1110, %v1074, 0
        %v1127 = vsel %vm1110, %v1075, 0
        %v1130 = vsel %vm1110, %v1076, 0
        %v1133 = vsel %vm1110, %v1077, 0
        %1135 = vmatprep.subr.bf16.mxu0 0
        %1136 = vmatpush1.bf16.msra.mxu0 %v1102
        %1137 = vmatprep.subr.bf16.mxu0 0
        %1138 = vmatpush1.bf16.msra.mxu0 %v1103
        %1139 = vmatprep.subr.bf16.mxu0 0
        %1140 = vmatpush1.bf16.msra.mxu0 %v1104
        %1141 = vmatprep.subr.bf16.mxu0 0
        %1142 = vmatpush1.bf16.msra.mxu0 %v1105
        %1143 = vmatprep.subr.bf16.mxu0 0
        %1144 = vmatpush1.bf16.msra.mxu0 0
        %1145 = vmatprep.subr.bf16.mxu0 0
        %1146 = vmatpush1.bf16.msra.mxu0 0
        %1147 = vmatprep.subr.bf16.mxu0 0
        %1148 = vmatpush1.bf16.msra.mxu0 0
        %1149 = vmatprep.subr.bf16.mxu0 0
        %1150 = vmatpush1.bf16.msra.mxu0 0
        %1151 = vmatprep.subr.bf16.mxu0 0
        %1152 = vmatpush1.bf16.msra.mxu0 0
        %1153 = vmatprep.subr.bf16.mxu0 0
        %1154 = vmatpush1.bf16.msra.mxu0 0
        %1155 = vmatprep.subr.bf16.mxu0 0
        %1156 = vmatpush1.bf16.msra.mxu0 0
        %1157 = vmatprep.subr.bf16.mxu0 0
        %1158 = vmatpush1.bf16.msra.mxu0 0
        %1159 = vmatprep.subr.bf16.mxu0 0
        %1160 = vmatpush1.bf16.msra.mxu0 0
        %1161 = vmatprep.subr.bf16.mxu0 0
        %1162 = vmatpush1.bf16.msra.mxu0 0
        %1163 = vmatprep.subr.bf16.mxu0 0
        %1164 = vmatpush1.bf16.msra.mxu0 0
        %1165 = vmatprep.subr.bf16.mxu0 0
        %1166 = vmatpush1.bf16.msra.mxu0 0
        %1167 = vmatprep.mubr.bf16.mxu0 0
        %1168 = vmatmul.mubr.bf16.gmra.mrb[0].mxu0 %v1112
        %v1169 = vpop.f32.mrb[0].mxu0
        %v1170 = vadd.f32 0.0, %v1169
        %v1171 = vpop.f32.mrb[0].mxu0
        %v1172 = vpop.f32.mrb[0].mxu0
        %v1173 = vadd.f32 0.0, %v1172
        %v1174 = vpop.f32.mrb[0].mxu0
        %1175 = vmatprep.mubr.bf16.mxu0 0
        %1176 = vmatmul.mubr.bf16.gmra.mrb[0].mxu0 %v1115
        %v1177 = vpop.f32.mrb[0].mxu0
        %v1178 = vadd.f32 0.0, %v1177
        %v1179 = vpop.f32.mrb[0].mxu0
        %v1180 = vpop.f32.mrb[0].mxu0
        %v1181 = vadd.f32 0.0, %v1180
        %v1182 = vpop.f32.mrb[0].mxu0
        %1183 = vmatprep.mubr.bf16.mxu0 0
        %1184 = vmatmul.mubr.bf16.gmra.mrb[0].mxu0 %v1118
        %v1185 = vpop.f32.mrb[0].mxu0
        %v1186 = vadd.f32 0.0, %v1185
        %v1187 = vpop.f32.mrb[0].mxu0
        %v1188 = vpop.f32.mrb[0].mxu0
        %v1189 = vadd.f32 0.0, %v1188
        %v1190 = vpop.f32.mrb[0].mxu0
        %1191 = vmatprep.mubr.bf16.mxu0 0
        %1192 = vmatmul.mubr.bf16.gmra.mrb[0].mxu0 %v1121
        %v1193 = vpop.f32.mrb[0].mxu0
        %v1194 = vadd.f32 0.0, %v1193
        %v1195 = vpop.f32.mrb[0].mxu0
        %v1196 = vpop.f32.mrb[0].mxu0
        %v1197 = vadd.f32 0.0, %v1196
        %v1198 = vpop.f32.mrb[0].mxu0
        %1199 = vmatprep.mubr.bf16.mxu0 0
        %1200 = vmatmul.mubr.bf16.gmra.mrb[0].mxu0 %v1124
        %v1201 = vpop.f32.mrb[0].mxu0
        %v1202 = vadd.f32 0.0, %v1201
        %v1203 = vpop.f32.mrb[0].mxu0
        %v1204 = vpop.f32.mrb[0].mxu0
        %v1205 = vadd.f32 0.0, %v1204
        %v1206 = vpop.f32.mrb[0].mxu0
        %1207 = vmatprep.mubr.bf16.mxu0 0
        %1208 = vmatmul.mubr.bf16.gmra.mrb[0].mxu0 %v1127
        %v1209 = vpop.f32.mrb[0].mxu0
        %v1210 = vadd.f32 0.0, %v1209
        %v1211 = vpop.f32.mrb[0].mxu0
        %v1212 = vpop.f32.mrb[0].mxu0
        %v1213 = vadd.f32 0.0, %v1212
        %v1214 = vpop.f32.mrb[0].mxu0
        %1215 = vmatprep.mubr.bf16.mxu0 0
        %1216 = vmatmul.mubr.bf16.gmra.mrb[0].mxu0 %v1130
        %v1217 = vpop.f32.mrb[0].mxu0
        %v1218 = vadd.f32 0.0, %v1217
        %v1219 = vpop.f32.mrb[0].mxu0
        %v1220 = vpop.f32.mrb[0].mxu0
        %v1221 = vadd.f32 0.0, %v1220
        %v1222 = vpop.f32.mrb[0].mxu0
        %1223 = vmatprep.mubr.bf16.mxu0 0
        %1224 = vmatmul.mubr.bf16.gmra.mrb[0].mxu0 %v1133
        %v1225 = vpop.f32.mrb[0].mxu0
        %v1226 = vadd.f32 0.0, %v1225
        %v1227 = vpop.f32.mrb[0].mxu0
        %v1228 = vpop.f32.mrb[0].mxu0
        %v1229 = vadd.f32 0.0, %v1228
        %v1230 = vpop.f32.mrb[0].mxu0
        %1231 = vdwg.mxu0
        %v1232 = vld [vmem:[%s5] sm:$0x1]
        %v1234 = vlaneseq
        %v1235 = vshrl.u32 %v1234, 7
        %v1236 = vsub.s32 0, %v1235
        %v1237 = vrot.slane %v1232, %v1236
        %v1239 = vmul.f32 %v1170, %v1237
        %v1240 = vmul.f32 %v1173, %v1237
        %v1241 = vmul.f32 %v1178, %v1237
        %v1242 = vmul.f32 %v1181, %v1237
        %v1243 = vmul.f32 %v1186, %v1237
        %v1244 = vmul.f32 %v1189, %v1237
        %v1245 = vmul.f32 %v1194, %v1237
        %v1246 = vmul.f32 %v1197, %v1237
        %v1247 = vmul.f32 %v1202, %v1237
        %v1248 = vmul.f32 %v1205, %v1237
        %v1249 = vmul.f32 %v1210, %v1237
        %v1250 = vmul.f32 %v1213, %v1237
        %v1251 = vmul.f32 %v1218, %v1237
        %v1252 = vmul.f32 %v1221, %v1237
        %v1253 = vmul.f32 %v1226, %v1237
        %v1254 = vmul.f32 %v1229, %v1237
        %v1255 = vld [vmem:[%s6] sm:$0x1]
        %v1257 = vlaneseq
        %v1258 = vshrl.u32 %v1257, 7
        %v1259 = vsub.s32 0, %v1258
        %v1260 = vrot.slane %v1255, %v1259
        %v1262 = vadd.f32 %v1239, %v1260
        %v1263 = vadd.f32 %v1240, %v1260
        %v1264 = vadd.f32 %v1241, %v1260
        %v1265 = vadd.f32 %v1242, %v1260
        %v1266 = vadd.f32 %v1243, %v1260
        %v1267 = vadd.f32 %v1244, %v1260
        %v1268 = vadd.f32 %v1245, %v1260
        %v1269 = vadd.f32 %v1246, %v1260
        %v1270 = vadd.f32 %v1247, %v1260
        %v1271 = vadd.f32 %v1248, %v1260
        %v1272 = vadd.f32 %v1249, %v1260
        %v1273 = vadd.f32 %v1250, %v1260
        %v1274 = vadd.f32 %v1251, %v1260
        %v1275 = vadd.f32 %v1252, %v1260
        %v1276 = vadd.f32 %v1253, %v1260
        %v1277 = vadd.f32 %v1254, %v1260
        %v1278 = vmax.f32 %v1262, 0.0
        %v1279 = vmax.f32 %v1263, 0.0
        %v1280 = vmax.f32 %v1264, 0.0
        %v1281 = vmax.f32 %v1265, 0.0
        %v1282 = vmax.f32 %v1266, 0.0
        %v1283 = vmax.f32 %v1267, 0.0
        %v1284 = vmax.f32 %v1268, 0.0
        %v1285 = vmax.f32 %v1269, 0.0
        %v1286 = vmax.f32 %v1270, 0.0
        %v1287 = vmax.f32 %v1271, 0.0
        %v1288 = vmax.f32 %v1272, 0.0
        %v1289 = vmax.f32 %v1273, 0.0
        %v1290 = vmax.f32 %v1274, 0.0
        %v1291 = vmax.f32 %v1275, 0.0
        %v1292 = vmax.f32 %v1276, 0.0
        %v1293 = vmax.f32 %v1277, 0.0
        %v1294 = vpack.c.bf16 %v1279, %v1278
        %v1295 = vpack.c.bf16 %v1281, %v1280
        %v1296 = vpack.c.bf16 %v1283, %v1282
        %v1297 = vpack.c.bf16 %v1285, %v1284
        %v1298 = vpack.c.bf16 %v1287, %v1286
        %v1299 = vpack.c.bf16 %v1289, %v1288
        %v1300 = vpack.c.bf16 %v1291, %v1290
        %v1301 = vpack.c.bf16 %v1293, %v1292
        %v1302 = vld [vmem:[%s7] sm:$0xf]
        %v1303 = vld [vmem:[%s7 + $0x4] sm:$0xf]
        %v1304 = vld [vmem:[%s7 + $0x8] sm:$0xf]
        %v1305 = vld [vmem:[%s7 + $0xc] sm:$0xf]
        %v1306 = vld [vmem:[%s7 + $0x10] sm:$0xf]
        %v1307 = vld [vmem:[%s7 + $0x14] sm:$0xf]
        %v1308 = vld [vmem:[%s7 + $0x18] sm:$0xf]
        %v1309 = vld [vmem:[%s7 + $0x1c] sm:$0xf]
        %v1318 = vunpack.c.l.b16 %v1302
        %v1319 = vunpack.c.l.b16 %v1303
        %v1320 = vunpack.c.l.b16 %v1304
        %v1321 = vunpack.c.l.b16 %v1305
        %v1322 = vunpack.c.l.b16 %v1306
        %v1323 = vunpack.c.l.b16 %v1307
        %v1324 = vunpack.c.l.b16 %v1308
        %v1325 = vunpack.c.l.b16 %v1309
        %v1326 = vpack.c.b16 %v1319, %v1318
        %v1327 = vpack.c.b16 %v1321, %v1320
        %v1328 = vpack.c.b16 %v1323, %v1322
        %v1329 = vpack.c.b16 %v1325, %v1324
        %v1335 = vsel %vm1110, %v1294, 0
        %v1338 = vsel %vm1110, %v1295, 0
        %v1341 = vsel %vm1110, %v1296, 0
        %v1344 = vsel %vm1110, %v1297, 0
        %v1347 = vsel %vm1110, %v1298, 0
        %v1350 = vsel %vm1110, %v1299, 0
        %v1353 = vsel %vm1110, %v1300, 0
        %v1356 = vsel %vm1110, %v1301, 0
        %1358 = vmatprep.subr.bf16.mxu0 0
        %1359 = vmatpush1.bf16.msra.mxu0 %v1326
        %1360 = vmatprep.subr.bf16.mxu0 0
        %1361 = vmatpush1.bf16.msra.mxu0 %v1327
        %1362 = vmatprep.subr.bf16.mxu0 0
        %1363 = vmatpush1.bf16.msra.mxu0 %v1328
        %1364 = vmatprep.subr.bf16.mxu0 0
        %1365 = vmatpush1.bf16.msra.mxu0 %v1329
        %1366 = vmatprep.subr.bf16.mxu0 0
        %1367 = vmatpush1.bf16.msra.mxu0 0
        %1368 = vmatprep.subr.bf16.mxu0 0
        %1369 = vmatpush1.bf16.msra.mxu0 0
        %1370 = vmatprep.subr.bf16.mxu0 0
        %1371 = vmatpush1.bf16.msra.mxu0 0
        %1372 = vmatprep.subr.bf16.mxu0 0
        %1373 = vmatpush1.bf16.msra.mxu0 0
        %1374 = vmatprep.subr.bf16.mxu0 0
        %1375 = vmatpush1.bf16.msra.mxu0 0
        %1376 = vmatprep.subr.bf16.mxu0 0
        %1377 = vmatpush1.bf16.msra.mxu0 0
        %1378 = vmatprep.subr.bf16.mxu0 0
        %1379 = vmatpush1.bf16.msra.mxu0 0
        %1380 = vmatprep.subr.bf16.mxu0 0
        %1381 = vmatpush1.bf16.msra.mxu0 0
        %1382 = vmatprep.subr.bf16.mxu0 0
        %1383 = vmatpush1.bf16.msra.mxu0 0
        %1384 = vmatprep.subr.bf16.mxu0 0
        %1385 = vmatpush1.bf16.msra.mxu0 0
        %1386 = vmatprep.subr.bf16.mxu0 0
        %1387 = vmatpush1.bf16.msra.mxu0 0
        %1388 = vmatprep.subr.bf16.mxu0 0
        %1389 = vmatpush1.bf16.msra.mxu0 0
        %1390 = vmatprep.mubr.bf16.mxu0 0
        %1391 = vmatmul.mubr.bf16.gmra.mrb[0].mxu0 %v1335
        %v1392 = vpop.f32.mrb[0].mxu0
        %v1393 = vadd.f32 0.0, %v1392
        %v1394 = vpop.f32.mrb[0].mxu0
        %v1395 = vpop.f32.mrb[0].mxu0
        %v1396 = vadd.f32 0.0, %v1395
        %v1397 = vpop.f32.mrb[0].mxu0
        %1398 = vmatprep.mubr.bf16.mxu0 0
        %1399 = vmatmul.mubr.bf16.gmra.mrb[0].mxu0 %v1338
        %v1400 = vpop.f32.mrb[0].mxu0
        %v1401 = vadd.f32 0.0, %v1400
        %v1402 = vpop.f32.mrb[0].mxu0
        %v1403 = vpop.f32.mrb[0].mxu0
        %v1404 = vadd.f32 0.0, %v1403
        %v1405 = vpop.f32.mrb[0].mxu0
        %1406 = vmatprep.mubr.bf16.mxu0 0
        %1407 = vmatmul.mubr.bf16.gmra.mrb[0].mxu0 %v1341
        %v1408 = vpop.f32.mrb[0].mxu0
        %v1409 = vadd.f32 0.0, %v1408
        %v1410 = vpop.f32.mrb[0].mxu0
        %v1411 = vpop.f32.mrb[0].mxu0
        %v1412 = vadd.f32 0.0, %v1411
        %v1413 = vpop.f32.mrb[0].mxu0
        %1414 = vmatprep.mubr.bf16.mxu0 0
        %1415 = vmatmul.mubr.bf16.gmra.mrb[0].mxu0 %v1344
        %v1416 = vpop.f32.mrb[0].mxu0
        %v1417 = vadd.f32 0.0, %v1416
        %v1418 = vpop.f32.mrb[0].mxu0
        %v1419 = vpop.f32.mrb[0].mxu0
        %v1420 = vadd.f32 0.0, %v1419
        %v1421 = vpop.f32.mrb[0].mxu0
        %1422 = vmatprep.mubr.bf16.mxu0 0
        %1423 = vmatmul.mubr.bf16.gmra.mrb[0].mxu0 %v1347
        %v1424 = vpop.f32.mrb[0].mxu0
        %v1425 = vadd.f32 0.0, %v1424
        %v1426 = vpop.f32.mrb[0].mxu0
        %v1427 = vpop.f32.mrb[0].mxu0
        %v1428 = vadd.f32 0.0, %v1427
        %v1429 = vpop.f32.mrb[0].mxu0
        %1430 = vmatprep.mubr.bf16.mxu0 0
        %1431 = vmatmul.mubr.bf16.gmra.mrb[0].mxu0 %v1350
        %v1432 = vpop.f32.mrb[0].mxu0
        %v1433 = vadd.f32 0.0, %v1432
        %v1434 = vpop.f32.mrb[0].mxu0
        %v1435 = vpop.f32.mrb[0].mxu0
        %v1436 = vadd.f32 0.0, %v1435
        %v1437 = vpop.f32.mrb[0].mxu0
        %1438 = vmatprep.mubr.bf16.mxu0 0
        %1439 = vmatmul.mubr.bf16.gmra.mrb[0].mxu0 %v1353
        %v1440 = vpop.f32.mrb[0].mxu0
        %v1441 = vadd.f32 0.0, %v1440
        %v1442 = vpop.f32.mrb[0].mxu0
        %v1443 = vpop.f32.mrb[0].mxu0
        %v1444 = vadd.f32 0.0, %v1443
        %v1445 = vpop.f32.mrb[0].mxu0
        %1446 = vmatprep.mubr.bf16.mxu0 0
        %1447 = vmatmul.mubr.bf16.gmra.mrb[0].mxu0 %v1356
        %v1448 = vpop.f32.mrb[0].mxu0
        %v1449 = vadd.f32 0.0, %v1448
        %v1450 = vpop.f32.mrb[0].mxu0
        %v1451 = vpop.f32.mrb[0].mxu0
        %v1452 = vadd.f32 0.0, %v1451
        %v1453 = vpop.f32.mrb[0].mxu0
        %1454 = vdwg.mxu0
        %v1455 = vld [vmem:[%s8] sm:$0x1]
        %v1457 = vlaneseq
        %v1458 = vshrl.u32 %v1457, 7
        %v1459 = vsub.s32 0, %v1458
        %v1460 = vrot.slane %v1455, %v1459
        %v1462 = vmul.f32 %v1393, %v1460
        %v1463 = vmul.f32 %v1396, %v1460
        %v1464 = vmul.f32 %v1401, %v1460
        %v1465 = vmul.f32 %v1404, %v1460
        %v1466 = vmul.f32 %v1409, %v1460
        %v1467 = vmul.f32 %v1412, %v1460
        %v1468 = vmul.f32 %v1417, %v1460
        %v1469 = vmul.f32 %v1420, %v1460
        %v1470 = vmul.f32 %v1425, %v1460
        %v1471 = vmul.f32 %v1428, %v1460
        %v1472 = vmul.f32 %v1433, %v1460
        %v1473 = vmul.f32 %v1436, %v1460
        %v1474 = vmul.f32 %v1441, %v1460
        %v1475 = vmul.f32 %v1444, %v1460
        %v1476 = vmul.f32 %v1449, %v1460
        %v1477 = vmul.f32 %v1452, %v1460
        %v1478 = vld [vmem:[%s9] sm:$0x1]
        %v1480 = vlaneseq
        %v1481 = vshrl.u32 %v1480, 7
        %v1482 = vsub.s32 0, %v1481
        %v1483 = vrot.slane %v1478, %v1482
        %v1485 = vadd.f32 %v1462, %v1483
        %v1486 = vadd.f32 %v1463, %v1483
        %v1487 = vadd.f32 %v1464, %v1483
        %v1488 = vadd.f32 %v1465, %v1483
        %v1489 = vadd.f32 %v1466, %v1483
        %v1490 = vadd.f32 %v1467, %v1483
        %v1491 = vadd.f32 %v1468, %v1483
        %v1492 = vadd.f32 %v1469, %v1483
        %v1493 = vadd.f32 %v1470, %v1483
        %v1494 = vadd.f32 %v1471, %v1483
        %v1495 = vadd.f32 %v1472, %v1483
        %v1496 = vadd.f32 %v1473, %v1483
        %v1497 = vadd.f32 %v1474, %v1483
        %v1498 = vadd.f32 %v1475, %v1483
        %v1499 = vadd.f32 %v1476, %v1483
        %v1500 = vadd.f32 %v1477, %v1483
        %v1501 = vmax.f32 %v1485, 0.0
        %v1502 = vmax.f32 %v1486, 0.0
        %v1503 = vmax.f32 %v1487, 0.0
        %v1504 = vmax.f32 %v1488, 0.0
        %v1505 = vmax.f32 %v1489, 0.0
        %v1506 = vmax.f32 %v1490, 0.0
        %v1507 = vmax.f32 %v1491, 0.0
        %v1508 = vmax.f32 %v1492, 0.0
        %v1509 = vmax.f32 %v1493, 0.0
        %v1510 = vmax.f32 %v1494, 0.0
        %v1511 = vmax.f32 %v1495, 0.0
        %v1512 = vmax.f32 %v1496, 0.0
        %v1513 = vmax.f32 %v1497, 0.0
        %v1514 = vmax.f32 %v1498, 0.0
        %v1515 = vmax.f32 %v1499, 0.0
        %v1516 = vmax.f32 %v1500, 0.0
        %v1517 = vpack.c.bf16 %v1502, %v1501
        %v1518 = vpack.c.bf16 %v1504, %v1503
        %v1519 = vpack.c.bf16 %v1506, %v1505
        %v1520 = vpack.c.bf16 %v1508, %v1507
        %v1521 = vpack.c.bf16 %v1510, %v1509
        %v1522 = vpack.c.bf16 %v1512, %v1511
        %v1523 = vpack.c.bf16 %v1514, %v1513
        %v1524 = vpack.c.bf16 %v1516, %v1515
        %v1525 = vld [vmem:[%s10] sm:$0xf]
        %v1526 = vld [vmem:[%s10 + $0x4] sm:$0xf]
        %v1527 = vld [vmem:[%s10 + $0x8] sm:$0xf]
        %v1528 = vld [vmem:[%s10 + $0xc] sm:$0xf]
        %v1529 = vld [vmem:[%s10 + $0x10] sm:$0xf]
        %v1530 = vld [vmem:[%s10 + $0x14] sm:$0xf]
        %v1531 = vld [vmem:[%s10 + $0x18] sm:$0xf]
        %v1532 = vld [vmem:[%s10 + $0x1c] sm:$0xf]
        %v1541 = vunpack.c.l.b16 %v1525
        %v1542 = vunpack.c.l.b16 %v1526
        %v1543 = vunpack.c.l.b16 %v1527
        %v1544 = vunpack.c.l.b16 %v1528
        %v1545 = vunpack.c.l.b16 %v1529
        %v1546 = vunpack.c.l.b16 %v1530
        %v1547 = vunpack.c.l.b16 %v1531
        %v1548 = vunpack.c.l.b16 %v1532
        %v1549 = vpack.c.b16 %v1542, %v1541
        %v1550 = vpack.c.b16 %v1544, %v1543
        %v1551 = vpack.c.b16 %v1546, %v1545
        %v1552 = vpack.c.b16 %v1548, %v1547
        %v1558 = vsel %vm1110, %v1517, 0
        %v1561 = vsel %vm1110, %v1518, 0
        %v1564 = vsel %vm1110, %v1519, 0
        %v1567 = vsel %vm1110, %v1520, 0
        %v1570 = vsel %vm1110, %v1521, 0
        %v1573 = vsel %vm1110, %v1522, 0
        %v1576 = vsel %vm1110, %v1523, 0
        %v1579 = vsel %vm1110, %v1524, 0
        %1581 = vmatprep.subr.bf16.mxu0 0
        %1582 = vmatpush1.bf16.msra.mxu0 %v1549
        %1583 = vmatprep.subr.bf16.mxu0 0
        %1584 = vmatpush1.bf16.msra.mxu0 %v1550
        %1585 = vmatprep.subr.bf16.mxu0 0
        %1586 = vmatpush1.bf16.msra.mxu0 %v1551
        %1587 = vmatprep.subr.bf16.mxu0 0
        %1588 = vmatpush1.bf16.msra.mxu0 %v1552
        %1589 = vmatprep.subr.bf16.mxu0 0
        %1590 = vmatpush1.bf16.msra.mxu0 0
        %1591 = vmatprep.subr.bf16.mxu0 0
        %1592 = vmatpush1.bf16.msra.mxu0 0
        %1593 = vmatprep.subr.bf16.mxu0 0
        %1594 = vmatpush1.bf16.msra.mxu0 0
        %1595 = vmatprep.subr.bf16.mxu0 0
        %1596 = vmatpush1.bf16.msra.mxu0 0
        %1597 = vmatprep.subr.bf16.mxu0 0
        %1598 = vmatpush1.bf16.msra.mxu0 0
        %1599 = vmatprep.subr.bf16.mxu0 0
        %1600 = vmatpush1.bf16.msra.mxu0 0
        %1601 = vmatprep.subr.bf16.mxu0 0
        %1602 = vmatpush1.bf16.msra.mxu0 0
        %1603 = vmatprep.subr.bf16.mxu0 0
        %1604 = vmatpush1.bf16.msra.mxu0 0
        %1605 = vmatprep.subr.bf16.mxu0 0
        %1606 = vmatpush1.bf16.msra.mxu0 0
        %1607 = vmatprep.subr.bf16.mxu0 0
        %1608 = vmatpush1.bf16.msra.mxu0 0
        %1609 = vmatprep.subr.bf16.mxu0 0
        %1610 = vmatpush1.bf16.msra.mxu0 0
        %1611 = vmatprep.subr.bf16.mxu0 0
        %1612 = vmatpush1.bf16.msra.mxu0 0
        %1613 = vmatprep.mubr.bf16.mxu0 0
        %1614 = vmatmul.mubr.bf16.gmra.mrb[0].mxu0 %v1558
        %v1615 = vpop.f32.mrb[0].mxu0
        %v1616 = vadd.f32 0.0, %v1615
        %v1617 = vpop.f32.mrb[0].mxu0
        %v1618 = vpop.f32.mrb[0].mxu0
        %v1619 = vadd.f32 0.0, %v1618
        %v1620 = vpop.f32.mrb[0].mxu0
        %1621 = vmatprep.mubr.bf16.mxu0 0
        %1622 = vmatmul.mubr.bf16.gmra.mrb[0].mxu0 %v1561
        %v1623 = vpop.f32.mrb[0].mxu0
        %v1624 = vadd.f32 0.0, %v1623
        %v1625 = vpop.f32.mrb[0].mxu0
        %v1626 = vpop.f32.mrb[0].mxu0
        %v1627 = vadd.f32 0.0, %v1626
        %v1628 = vpop.f32.mrb[0].mxu0
        %1629 = vmatprep.mubr.bf16.mxu0 0
        %1630 = vmatmul.mubr.bf16.gmra.mrb[0].mxu0 %v1564
        %v1631 = vpop.f32.mrb[0].mxu0
        %v1632 = vadd.f32 0.0, %v1631
        %v1633 = vpop.f32.mrb[0].mxu0
        %v1634 = vpop.f32.mrb[0].mxu0
        %v1635 = vadd.f32 0.0, %v1634
        %v1636 = vpop.f32.mrb[0].mxu0
        %1637 = vmatprep.mubr.bf16.mxu0 0
        %1638 = vmatmul.mubr.bf16.gmra.mrb[0].mxu0 %v1567
        %v1639 = vpop.f32.mrb[0].mxu0
        %v1640 = vadd.f32 0.0, %v1639
        %v1641 = vpop.f32.mrb[0].mxu0
        %v1642 = vpop.f32.mrb[0].mxu0
        %v1643 = vadd.f32 0.0, %v1642
        %v1644 = vpop.f32.mrb[0].mxu0
        %1645 = vmatprep.mubr.bf16.mxu0 0
        %1646 = vmatmul.mubr.bf16.gmra.mrb[0].mxu0 %v1570
        %v1647 = vpop.f32.mrb[0].mxu0
        %v1648 = vadd.f32 0.0, %v1647
        %v1649 = vpop.f32.mrb[0].mxu0
        %v1650 = vpop.f32.mrb[0].mxu0
        %v1651 = vadd.f32 0.0, %v1650
        %v1652 = vpop.f32.mrb[0].mxu0
        %1653 = vmatprep.mubr.bf16.mxu0 0
        %1654 = vmatmul.mubr.bf16.gmra.mrb[0].mxu0 %v1573
        %v1655 = vpop.f32.mrb[0].mxu0
        %v1656 = vadd.f32 0.0, %v1655
        %v1657 = vpop.f32.mrb[0].mxu0
        %v1658 = vpop.f32.mrb[0].mxu0
        %v1659 = vadd.f32 0.0, %v1658
        %v1660 = vpop.f32.mrb[0].mxu0
        %1661 = vmatprep.mubr.bf16.mxu0 0
        %1662 = vmatmul.mubr.bf16.gmra.mrb[0].mxu0 %v1576
        %v1663 = vpop.f32.mrb[0].mxu0
        %v1664 = vadd.f32 0.0, %v1663
        %v1665 = vpop.f32.mrb[0].mxu0
        %v1666 = vpop.f32.mrb[0].mxu0
        %v1667 = vadd.f32 0.0, %v1666
        %v1668 = vpop.f32.mrb[0].mxu0
        %1669 = vmatprep.mubr.bf16.mxu0 0
        %1670 = vmatmul.mubr.bf16.gmra.mrb[0].mxu0 %v1579
        %v1671 = vpop.f32.mrb[0].mxu0
        %v1672 = vadd.f32 0.0, %v1671
        %v1673 = vpop.f32.mrb[0].mxu0
        %v1674 = vpop.f32.mrb[0].mxu0
        %v1675 = vadd.f32 0.0, %v1674
        %v1676 = vpop.f32.mrb[0].mxu0
        %1677 = vdwg.mxu0
        %v1678 = vld [vmem:[%s11] sm:$0x1]
        %v1680 = vlaneseq
        %v1681 = vshrl.u32 %v1680, 7
        %v1682 = vsub.s32 0, %v1681
        %v1683 = vrot.slane %v1678, %v1682
        %v1685 = vmul.f32 %v1616, %v1683
        %v1686 = vmul.f32 %v1619, %v1683
        %v1687 = vmul.f32 %v1624, %v1683
        %v1688 = vmul.f32 %v1627, %v1683
        %v1689 = vmul.f32 %v1632, %v1683
        %v1690 = vmul.f32 %v1635, %v1683
        %v1691 = vmul.f32 %v1640, %v1683
        %v1692 = vmul.f32 %v1643, %v1683
        %v1693 = vmul.f32 %v1648, %v1683
        %v1694 = vmul.f32 %v1651, %v1683
        %v1695 = vmul.f32 %v1656, %v1683
        %v1696 = vmul.f32 %v1659, %v1683
        %v1697 = vmul.f32 %v1664, %v1683
        %v1698 = vmul.f32 %v1667, %v1683
        %v1699 = vmul.f32 %v1672, %v1683
        %v1700 = vmul.f32 %v1675, %v1683
        %v1701 = vld [vmem:[%s12] sm:$0x1]
        %v1703 = vlaneseq
        %v1704 = vshrl.u32 %v1703, 7
        %v1705 = vsub.s32 0, %v1704
        %v1706 = vrot.slane %v1701, %v1705
        %v1708 = vadd.f32 %v1685, %v1706
        %v1709 = vadd.f32 %v1686, %v1706
        %v1710 = vadd.f32 %v1687, %v1706
        %v1711 = vadd.f32 %v1688, %v1706
        %v1712 = vadd.f32 %v1689, %v1706
        %v1713 = vadd.f32 %v1690, %v1706
        %v1714 = vadd.f32 %v1691, %v1706
        %v1715 = vadd.f32 %v1692, %v1706
        %v1716 = vadd.f32 %v1693, %v1706
        %v1717 = vadd.f32 %v1694, %v1706
        %v1718 = vadd.f32 %v1695, %v1706
        %v1719 = vadd.f32 %v1696, %v1706
        %v1720 = vadd.f32 %v1697, %v1706
        %v1721 = vadd.f32 %v1698, %v1706
        %v1722 = vadd.f32 %v1699, %v1706
        %v1723 = vadd.f32 %v1700, %v1706
        %v1724 = vmax.f32 %v1708, 0.0
        %v1725 = vmax.f32 %v1709, 0.0
        %v1726 = vmax.f32 %v1710, 0.0
        %v1727 = vmax.f32 %v1711, 0.0
        %v1728 = vmax.f32 %v1712, 0.0
        %v1729 = vmax.f32 %v1713, 0.0
        %v1730 = vmax.f32 %v1714, 0.0
        %v1731 = vmax.f32 %v1715, 0.0
        %v1732 = vmax.f32 %v1716, 0.0
        %v1733 = vmax.f32 %v1717, 0.0
        %v1734 = vmax.f32 %v1718, 0.0
        %v1735 = vmax.f32 %v1719, 0.0
        %v1736 = vmax.f32 %v1720, 0.0
        %v1737 = vmax.f32 %v1721, 0.0
        %v1738 = vmax.f32 %v1722, 0.0
        %v1739 = vmax.f32 %v1723, 0.0
        %v1740 = vpack.c.bf16 %v1725, %v1724
        %v1741 = vpack.c.bf16 %v1727, %v1726
        %v1742 = vpack.c.bf16 %v1729, %v1728
        %v1743 = vpack.c.bf16 %v1731, %v1730
        %v1744 = vpack.c.bf16 %v1733, %v1732
        %v1745 = vpack.c.bf16 %v1735, %v1734
        %v1746 = vpack.c.bf16 %v1737, %v1736
        %v1747 = vpack.c.bf16 %v1739, %v1738
        %v1748 = vld [vmem:[%s13] sm:$0xf]
        %v1749 = vld [vmem:[%s13 + $0x4] sm:$0xf]
        %v1750 = vld [vmem:[%s13 + $0x8] sm:$0xf]
        %v1751 = vld [vmem:[%s13 + $0xc] sm:$0xf]
        %v1752 = vld [vmem:[%s13 + $0x10] sm:$0xf]
        %v1753 = vld [vmem:[%s13 + $0x14] sm:$0xf]
        %v1754 = vld [vmem:[%s13 + $0x18] sm:$0xf]
        %v1755 = vld [vmem:[%s13 + $0x1c] sm:$0xf]
        %v1756 = vld [vmem:[%s13 + $0x20] sm:$0xf]
        %v1757 = vld [vmem:[%s13 + $0x24] sm:$0xf]
        %v1758 = vld [vmem:[%s13 + $0x28] sm:$0xf]
        %v1759 = vld [vmem:[%s13 + $0x2c] sm:$0xf]
        %v1760 = vld [vmem:[%s13 + $0x30] sm:$0xf]
        %v1761 = vld [vmem:[%s13 + $0x34] sm:$0xf]
        %v1762 = vld [vmem:[%s13 + $0x38] sm:$0xf]
        %v1763 = vld [vmem:[%s13 + $0x3c] sm:$0xf]
        %v1780 = vunpack.c.l.b16 %v1748
        %v1781 = vunpack.c.l.b16 %v1749
        %v1782 = vunpack.c.l.b16 %v1750
        %v1783 = vunpack.c.l.b16 %v1751
        %v1784 = vunpack.c.l.b16 %v1752
        %v1785 = vunpack.c.l.b16 %v1753
        %v1786 = vunpack.c.l.b16 %v1754
        %v1787 = vunpack.c.l.b16 %v1755
        %v1788 = vunpack.c.l.b16 %v1756
        %v1789 = vunpack.c.l.b16 %v1757
        %v1790 = vunpack.c.l.b16 %v1758
        %v1791 = vunpack.c.l.b16 %v1759
        %v1792 = vunpack.c.l.b16 %v1760
        %v1793 = vunpack.c.l.b16 %v1761
        %v1794 = vunpack.c.l.b16 %v1762
        %v1795 = vunpack.c.l.b16 %v1763
        %v1796 = vpack.c.b16 %v1781, %v1780
        %v1797 = vpack.c.b16 %v1783, %v1782
        %v1798 = vpack.c.b16 %v1785, %v1784
        %v1799 = vpack.c.b16 %v1787, %v1786
        %v1800 = vpack.c.b16 %v1789, %v1788
        %v1801 = vpack.c.b16 %v1791, %v1790
        %v1802 = vpack.c.b16 %v1793, %v1792
        %v1803 = vpack.c.b16 %v1795, %v1794
        %1812 = vmatprep.subr.bf16.mxu0 0
        %1813 = vmatpush1.bf16.msra.mxu0 %v1796
        %1814 = vmatprep.subr.bf16.mxu0 0
        %1815 = vmatpush1.bf16.msra.mxu0 %v1797
        %1816 = vmatprep.subr.bf16.mxu0 0
        %1817 = vmatpush1.bf16.msra.mxu0 %v1798
        %1818 = vmatprep.subr.bf16.mxu0 0
        %1819 = vmatpush1.bf16.msra.mxu0 %v1799
        %1820 = vmatprep.subr.bf16.mxu0 0
        %1821 = vmatpush1.bf16.msra.mxu0 %v1800
        %1822 = vmatprep.subr.bf16.mxu0 0
        %1823 = vmatpush1.bf16.msra.mxu0 %v1801
        %1824 = vmatprep.subr.bf16.mxu0 0
        %1825 = vmatpush1.bf16.msra.mxu0 %v1802
        %1826 = vmatprep.subr.bf16.mxu0 0
        %1827 = vmatpush1.bf16.msra.mxu0 %v1803
        %1828 = vmatprep.subr.bf16.mxu0 0
        %1829 = vmatpush1.bf16.msra.mxu0 0
        %1830 = vmatprep.subr.bf16.mxu0 0
        %1831 = vmatpush1.bf16.msra.mxu0 0
        %1832 = vmatprep.subr.bf16.mxu0 0
        %1833 = vmatpush1.bf16.msra.mxu0 0
        %1834 = vmatprep.subr.bf16.mxu0 0
        %1835 = vmatpush1.bf16.msra.mxu0 0
        %1836 = vmatprep.subr.bf16.mxu0 0
        %1837 = vmatpush1.bf16.msra.mxu0 0
        %1838 = vmatprep.subr.bf16.mxu0 0
        %1839 = vmatpush1.bf16.msra.mxu0 0
        %1840 = vmatprep.subr.bf16.mxu0 0
        %1841 = vmatpush1.bf16.msra.mxu0 0
        %1842 = vmatprep.subr.bf16.mxu0 0
        %1843 = vmatpush1.bf16.msra.mxu0 0
        %1844 = vmatprep.mubr.bf16.mxu0 0
        %1845 = vmatmul.mubr.bf16.gmra.mrb[0].mxu0 %v1740
        %v1846 = vpop.f32.mrb[0].mxu0
        %v1847 = vadd.f32 0.0, %v1846
        %v1848 = vpop.f32.mrb[0].mxu0
        %v1849 = vpop.f32.mrb[0].mxu0
        %v1850 = vadd.f32 0.0, %v1849
        %v1851 = vpop.f32.mrb[0].mxu0
        %1852 = vmatprep.mubr.bf16.mxu0 0
        %1853 = vmatmul.mubr.bf16.gmra.mrb[0].mxu0 %v1741
        %v1854 = vpop.f32.mrb[0].mxu0
        %v1855 = vadd.f32 0.0, %v1854
        %v1856 = vpop.f32.mrb[0].mxu0
        %v1857 = vpop.f32.mrb[0].mxu0
        %v1858 = vadd.f32 0.0, %v1857
        %v1859 = vpop.f32.mrb[0].mxu0
        %1860 = vmatprep.mubr.bf16.mxu0 0
        %1861 = vmatmul.mubr.bf16.gmra.mrb[0].mxu0 %v1742
        %v1862 = vpop.f32.mrb[0].mxu0
        %v1863 = vadd.f32 0.0, %v1862
        %v1864 = vpop.f32.mrb[0].mxu0
        %v1865 = vpop.f32.mrb[0].mxu0
        %v1866 = vadd.f32 0.0, %v1865
        %v1867 = vpop.f32.mrb[0].mxu0
        %1868 = vmatprep.mubr.bf16.mxu0 0
        %1869 = vmatmul.mubr.bf16.gmra.mrb[0].mxu0 %v1743
        %v1870 = vpop.f32.mrb[0].mxu0
        %v1871 = vadd.f32 0.0, %v1870
        %v1872 = vpop.f32.mrb[0].mxu0
        %v1873 = vpop.f32.mrb[0].mxu0
        %v1874 = vadd.f32 0.0, %v1873
        %v1875 = vpop.f32.mrb[0].mxu0
        %1876 = vmatprep.mubr.bf16.mxu0 0
        %1877 = vmatmul.mubr.bf16.gmra.mrb[0].mxu0 %v1744
        %v1878 = vpop.f32.mrb[0].mxu0
        %v1879 = vadd.f32 0.0, %v1878
        %v1880 = vpop.f32.mrb[0].mxu0
        %v1881 = vpop.f32.mrb[0].mxu0
        %v1882 = vadd.f32 0.0, %v1881
        %v1883 = vpop.f32.mrb[0].mxu0
        %1884 = vmatprep.mubr.bf16.mxu0 0
        %1885 = vmatmul.mubr.bf16.gmra.mrb[0].mxu0 %v1745
        %v1886 = vpop.f32.mrb[0].mxu0
        %v1887 = vadd.f32 0.0, %v1886
        %v1888 = vpop.f32.mrb[0].mxu0
        %v1889 = vpop.f32.mrb[0].mxu0
        %v1890 = vadd.f32 0.0, %v1889
        %v1891 = vpop.f32.mrb[0].mxu0
        %1892 = vmatprep.mubr.bf16.mxu0 0
        %1893 = vmatmul.mubr.bf16.gmra.mrb[0].mxu0 %v1746
        %v1894 = vpop.f32.mrb[0].mxu0
        %v1895 = vadd.f32 0.0, %v1894
        %v1896 = vpop.f32.mrb[0].mxu0
        %v1897 = vpop.f32.mrb[0].mxu0
        %v1898 = vadd.f32 0.0, %v1897
        %v1899 = vpop.f32.mrb[0].mxu0
        %1900 = vmatprep.mubr.bf16.mxu0 0
        %1901 = vmatmul.mubr.bf16.gmra.mrb[0].mxu0 %v1747
        %v1902 = vpop.f32.mrb[0].mxu0
        %v1903 = vadd.f32 0.0, %v1902
        %v1904 = vpop.f32.mrb[0].mxu0
        %v1905 = vpop.f32.mrb[0].mxu0
        %v1906 = vadd.f32 0.0, %v1905
        %v1907 = vpop.f32.mrb[0].mxu0
        %1908 = vdwg.mxu0
        %v1909 = vld [vmem:[%s14] sm:$0x1]
        %v1911 = vlaneseq
        %v1912 = vshrl.u32 %v1911, 7
        %v1913 = vsub.s32 0, %v1912
        %v1914 = vrot.slane %v1909, %v1913
        %v1916 = vmul.f32 %v1847, %v1914
        %v1917 = vmul.f32 %v1850, %v1914
        %v1918 = vmul.f32 %v1855, %v1914
        %v1919 = vmul.f32 %v1858, %v1914
        %v1920 = vmul.f32 %v1863, %v1914
        %v1921 = vmul.f32 %v1866, %v1914
        %v1922 = vmul.f32 %v1871, %v1914
        %v1923 = vmul.f32 %v1874, %v1914
        %v1924 = vmul.f32 %v1879, %v1914
        %v1925 = vmul.f32 %v1882, %v1914
        %v1926 = vmul.f32 %v1887, %v1914
        %v1927 = vmul.f32 %v1890, %v1914
        %v1928 = vmul.f32 %v1895, %v1914
        %v1929 = vmul.f32 %v1898, %v1914
        %v1930 = vmul.f32 %v1903, %v1914
        %v1931 = vmul.f32 %v1906, %v1914
        %v1932 = vld [vmem:[%s15] sm:$0x1]
        %v1934 = vlaneseq
        %v1935 = vshrl.u32 %v1934, 7
        %v1936 = vsub.s32 0, %v1935
        %v1937 = vrot.slane %v1932, %v1936
        %v1939 = vadd.f32 %v1916, %v1937
        %v1940 = vadd.f32 %v1917, %v1937
        %v1941 = vadd.f32 %v1918, %v1937
        %v1942 = vadd.f32 %v1919, %v1937
        %v1943 = vadd.f32 %v1920, %v1937
        %v1944 = vadd.f32 %v1921, %v1937
        %v1945 = vadd.f32 %v1922, %v1937
        %v1946 = vadd.f32 %v1923, %v1937
        %v1947 = vadd.f32 %v1924, %v1937
        %v1948 = vadd.f32 %v1925, %v1937
        %v1949 = vadd.f32 %v1926, %v1937
        %v1950 = vadd.f32 %v1927, %v1937
        %v1951 = vadd.f32 %v1928, %v1937
        %v1952 = vadd.f32 %v1929, %v1937
        %v1953 = vadd.f32 %v1930, %v1937
        %v1954 = vadd.f32 %v1931, %v1937
        %v1955 = vmax.f32 %v1939, 0.0
        %v1956 = vmax.f32 %v1940, 0.0
        %v1957 = vmax.f32 %v1941, 0.0
        %v1958 = vmax.f32 %v1942, 0.0
        %v1959 = vmax.f32 %v1943, 0.0
        %v1960 = vmax.f32 %v1944, 0.0
        %v1961 = vmax.f32 %v1945, 0.0
        %v1962 = vmax.f32 %v1946, 0.0
        %v1963 = vmax.f32 %v1947, 0.0
        %v1964 = vmax.f32 %v1948, 0.0
        %v1965 = vmax.f32 %v1949, 0.0
        %v1966 = vmax.f32 %v1950, 0.0
        %v1967 = vmax.f32 %v1951, 0.0
        %v1968 = vmax.f32 %v1952, 0.0
        %v1969 = vmax.f32 %v1953, 0.0
        %v1970 = vmax.f32 %v1954, 0.0
        %v1971 = vld [vmem:[#allocation2] sm:$0x1]
        %v1972 = vsel %vm1110, %v1955, -inf
        %v1973 = vsel %vm1110, %v1956, -inf
        %v1974 = vsel %vm1110, %v1957, -inf
        %v1975 = vsel %vm1110, %v1958, -inf
        %v1976 = vsel %vm1110, %v1959, -inf
        %v1977 = vmax.f32 %v1972, %v1976
        %v1978 = vsel %vm1110, %v1960, -inf
        %v1979 = vmax.f32 %v1973, %v1978
        %v1980 = vsel %vm1110, %v1961, -inf
        %v1981 = vmax.f32 %v1974, %v1980
        %v1982 = vsel %vm1110, %v1962, -inf
        %v1983 = vmax.f32 %v1975, %v1982
        %v1984 = vsel %vm1110, %v1963, -inf
        %v1985 = vmax.f32 %v1977, %v1984
        %v1986 = vsel %vm1110, %v1964, -inf
        %v1987 = vmax.f32 %v1979, %v1986
        %v1988 = vsel %vm1110, %v1965, -inf
        %v1989 = vmax.f32 %v1981, %v1988
        %v1990 = vsel %vm1110, %v1966, -inf
        %v1991 = vmax.f32 %v1983, %v1990
        %v1992 = vsel %vm1110, %v1967, -inf
        %v1993 = vmax.f32 %v1985, %v1992
        %v1994 = vsel %vm1110, %v1968, -inf
        %v1995 = vmax.f32 %v1987, %v1994
        %v1996 = vsel %vm1110, %v1969, -inf
        %v1997 = vmax.f32 %v1989, %v1996
        %v1998 = vsel %vm1110, %v1970, -inf
        %v1999 = vmax.f32 %v1991, %v1998
        %v2000 = vmax.f32 %v1993, %v1995
        %v2001 = vmax.f32 %v1997, %v1999
        %v2002 = vmax.f32 %v2000, %v2001
        %v2003 = vrot.slane %v2002, 4
        %v2004 = vmax.f32 %v2002, %v2003
        %v2005 = vrot.slane %v2004, 2
        %v2006 = vmax.f32 %v2004, %v2005
        %v2007 = vrot.slane %v2006, 1
        %v2008 = vmax.f32 %v2006, %v2007
        %v2009 = vmax.f32 %v1971, %v2008
        %vm2010 = vcmask 516096
        %2011 = vst.msk [vmem:[#allocation2] sm:$0x1] %vm2010, %v2009
        %p2012 = scmp.eq.s32.totalorder %s40, 1
        // Predicated region
        $region109: #{tpu_custom_call.1} parent=103 // pred_check
          %p2013 = pneg %p2012
        $region110: #{tpu_custom_call.1} parent=103 // pred_check_branch
          %2015 = sbr.rel (%p2013) target = $region112
        $region111: #{tpu_custom_call.1} parent=103 // pred_region
          %v2016 = vld [vmem:[#allocation2] sm:$0x1]
          %v2017 = vpack.c.bf16 %v2016, %v2016
          %v2018 = vld [vmem:[%s16] sm:$0xff]
          %v2019 = vld [vmem:[%s16 + $0x8] sm:$0xff]
          %v2020 = vld [vmem:[%s16 + $0x10] sm:$0xff]
          %v2021 = vld [vmem:[%s16 + $0x18] sm:$0xff]
          %v2022 = vld [vmem:[%s16 + $0x20] sm:$0xff]
          %v2023 = vld [vmem:[%s16 + $0x28] sm:$0xff]
          %v2024 = vld [vmem:[%s16 + $0x30] sm:$0xff]
          %v2025 = vld [vmem:[%s16 + $0x38] sm:$0xff]
          %v2026 = vld [vmem:[%s16 + $0x40] sm:$0xff]
          %v2027 = vld [vmem:[%s16 + $0x48] sm:$0xff]
          %v2028 = vld [vmem:[%s16 + $0x50] sm:$0xff]
          %v2029 = vld [vmem:[%s16 + $0x58] sm:$0xff]
          %v2030 = vld [vmem:[%s16 + $0x60] sm:$0xff]
          %v2031 = vld [vmem:[%s16 + $0x68] sm:$0xff]
          %v2032 = vld [vmem:[%s16 + $0x70] sm:$0xff]
          %v2033 = vld [vmem:[%s16 + $0x78] sm:$0xff]
          %v2050 = vunpack.c.l.b16 %v2018
          %v2051 = vunpack.c.h.b16 %v2018
          %v2052 = vunpack.c.l.b16 %v2019
          %v2053 = vunpack.c.h.b16 %v2019
          %v2054 = vunpack.c.l.b16 %v2020
          %v2055 = vunpack.c.h.b16 %v2020
          %v2056 = vunpack.c.l.b16 %v2021
          %v2057 = vunpack.c.h.b16 %v2021
          %v2058 = vunpack.c.l.b16 %v2022
          %v2059 = vunpack.c.h.b16 %v2022
          %v2060 = vunpack.c.l.b16 %v2023
          %v2061 = vunpack.c.h.b16 %v2023
          %v2062 = vunpack.c.l.b16 %v2024
          %v2063 = vunpack.c.h.b16 %v2024
          %v2064 = vunpack.c.l.b16 %v2025
          %v2065 = vunpack.c.h.b16 %v2025
          %v2066 = vunpack.c.l.b16 %v2026
          %v2067 = vunpack.c.h.b16 %v2026
          %v2068 = vunpack.c.l.b16 %v2027
          %v2069 = vunpack.c.h.b16 %v2027
          %v2070 = vunpack.c.l.b16 %v2028
          %v2071 = vunpack.c.h.b16 %v2028
          %v2072 = vunpack.c.l.b16 %v2029
          %v2073 = vunpack.c.h.b16 %v2029
          %v2074 = vunpack.c.l.b16 %v2030
          %v2075 = vunpack.c.h.b16 %v2030
          %v2076 = vunpack.c.l.b16 %v2031
          %v2077 = vunpack.c.h.b16 %v2031
          %v2078 = vunpack.c.l.b16 %v2032
          %v2079 = vunpack.c.h.b16 %v2032
          %v2080 = vunpack.c.l.b16 %v2033
          %v2081 = vunpack.c.h.b16 %v2033
          %v2082 = vpack.c.b16 %v2054, %v2050
          %v2083 = vpack.c.b16 %v2055, %v2051
          %v2084 = vpack.c.b16 %v2056, %v2052
          %v2085 = vpack.c.b16 %v2057, %v2053
          %v2086 = vpack.c.b16 %v2062, %v2058
          %v2087 = vpack.c.b16 %v2063, %v2059
          %v2088 = vpack.c.b16 %v2064, %v2060
          %v2089 = vpack.c.b16 %v2065, %v2061
          %v2090 = vpack.c.b16 %v2070, %v2066
          %v2091 = vpack.c.b16 %v2071, %v2067
          %v2092 = vpack.c.b16 %v2072, %v2068
          %v2093 = vpack.c.b16 %v2073, %v2069
          %v2094 = vpack.c.b16 %v2078, %v2074
          %v2095 = vpack.c.b16 %v2079, %v2075
          %v2096 = vpack.c.b16 %v2080, %v2076
          %v2097 = vpack.c.b16 %v2081, %v2077
          %v2115 = vsel %vm1110, %v2017, 0
          %2117 = vmatprep.subr.bf16.mxu0 %v2083
          %2118 = vmatpush1.bf16.msra.mxu0 %v2082
          %2119 = vmatprep.subr.bf16.mxu0 %v2087
          %2120 = vmatpush1.bf16.msra.mxu0 %v2086
          %2121 = vmatprep.subr.bf16.mxu0 %v2091
          %2122 = vmatpush1.bf16.msra.mxu0 %v2090
          %2123 = vmatprep.subr.bf16.mxu0 %v2095
          %2124 = vmatpush1.bf16.msra.mxu0 %v2094
          %2125 = vmatprep.subr.bf16.mxu0 0
          %2126 = vmatpush1.bf16.msra.mxu0 0
          %2127 = vmatprep.subr.bf16.mxu0 0
          %2128 = vmatpush1.bf16.msra.mxu0 0
          %2129 = vmatprep.subr.bf16.mxu0 0
          %2130 = vmatpush1.bf16.msra.mxu0 0
          %2131 = vmatprep.subr.bf16.mxu0 0
          %2132 = vmatpush1.bf16.msra.mxu0 0
          %2133 = vmatprep.subr.bf16.mxu0 0
          %2134 = vmatpush1.bf16.msra.mxu0 0
          %2135 = vmatprep.subr.bf16.mxu0 0
          %2136 = vmatpush1.bf16.msra.mxu0 0
          %2137 = vmatprep.subr.bf16.mxu0 0
          %2138 = vmatpush1.bf16.msra.mxu0 0
          %2139 = vmatprep.subr.bf16.mxu0 0
          %2140 = vmatpush1.bf16.msra.mxu0 0
          %2141 = vmatprep.subr.bf16.mxu0 0
          %2142 = vmatpush1.bf16.msra.mxu0 0
          %2143 = vmatprep.subr.bf16.mxu0 0
          %2144 = vmatpush1.bf16.msra.mxu0 0
          %2145 = vmatprep.subr.bf16.mxu0 0
          %2146 = vmatpush1.bf16.msra.mxu0 0
          %2147 = vmatprep.subr.bf16.mxu0 0
          %2148 = vmatpush1.bf16.msra.mxu0 0
          %2149 = vmatprep.mubr.bf16.mxu0 0
          %2150 = vmatmul.mubr.bf16.gmra.mrb[0].mxu0 %v2115
          %v2151 = vpop.f32.mrb[0].mxu0
          %v2152 = vadd.f32 0.0, %v2151
          %v2153 = vpop.f32.mrb[0].mxu0
          %v2154 = vadd.f32 0.0, %v2153
          %v2155 = vpop.f32.mrb[0].mxu0
          %v2156 = vpop.f32.mrb[0].mxu0
          %2157 = vdwg.mxu0
          %2158 = vmatprep.subr.bf16.mxu0 %v2085
          %2159 = vmatpush1.bf16.msra.mxu0 %v2084
          %2160 = vmatprep.subr.bf16.mxu0 %v2089
          %2161 = vmatpush1.bf16.msra.mxu0 %v2088
          %2162 = vmatprep.subr.bf16.mxu0 %v2093
          %2163 = vmatpush1.bf16.msra.mxu0 %v2092
          %2164 = vmatprep.subr.bf16.mxu0 %v2097
          %2165 = vmatpush1.bf16.msra.mxu0 %v2096
          %2166 = vmatprep.subr.bf16.mxu0 0
          %2167 = vmatpush1.bf16.msra.mxu0 0
          %2168 = vmatprep.subr.bf16.mxu0 0
          %2169 = vmatpush1.bf16.msra.mxu0 0
          %2170 = vmatprep.subr.bf16.mxu0 0
          %2171 = vmatpush1.bf16.msra.mxu0 0
          %2172 = vmatprep.subr.bf16.mxu0 0
          %2173 = vmatpush1.bf16.msra.mxu0 0
          %2174 = vmatprep.subr.bf16.mxu0 0
          %2175 = vmatpush1.bf16.msra.mxu0 0
          %2176 = vmatprep.subr.bf16.mxu0 0
          %2177 = vmatpush1.bf16.msra.mxu0 0
          %2178 = vmatprep.subr.bf16.mxu0 0
          %2179 = vmatpush1.bf16.msra.mxu0 0
          %2180 = vmatprep.subr.bf16.mxu0 0
          %2181 = vmatpush1.bf16.msra.mxu0 0
          %2182 = vmatprep.subr.bf16.mxu0 0
          %2183 = vmatpush1.bf16.msra.mxu0 0
          %2184 = vmatprep.subr.bf16.mxu0 0
          %2185 = vmatpush1.bf16.msra.mxu0 0
          %2186 = vmatprep.subr.bf16.mxu0 0
          %2187 = vmatpush1.bf16.msra.mxu0 0
          %2188 = vmatprep.subr.bf16.mxu0 0
          %2189 = vmatpush1.bf16.msra.mxu0 0
          %2190 = vmatprep.mubr.bf16.mxu0 0
          %2191 = vmatmul.mubr.bf16.gmra.mrb[0].mxu0 %v2115
          %v2192 = vpop.f32.mrb[0].mxu0
          %v2193 = vadd.f32 0.0, %v2192
          %v2194 = vpop.f32.mrb[0].mxu0
          %v2195 = vadd.f32 0.0, %v2194
          %v2196 = vpop.f32.mrb[0].mxu0
          %v2197 = vpop.f32.mrb[0].mxu0
          %2198 = vdwg.mxu0
          %v2199 = vld [vmem:[%s17] sm:$0xf]
          %v2201 = vlaneseq
          %v2202 = vshrl.u32 %v2201, 7
          %v2203 = vsub.s32 0, %v2202
          %v2204 = vrot.slane %v2199, %v2203
          %v2205 = vlaneseq
          %v2206 = vshrl.u32 %v2205, 7
          %v2207 = vsub.s32 1, %v2206
          %v2208 = vrot.slane %v2199, %v2207
          %v2209 = vlaneseq
          %v2210 = vshrl.u32 %v2209, 7
          %v2211 = vsub.s32 2, %v2210
          %v2212 = vrot.slane %v2199, %v2211
          %v2213 = vlaneseq
          %v2214 = vshrl.u32 %v2213, 7
          %v2215 = vsub.s32 3, %v2214
          %v2216 = vrot.slane %v2199, %v2215
          %v2221 = vmul.f32 %v2152, %v2204
          %v2222 = vmul.f32 %v2154, %v2208
          %v2223 = vmul.f32 %v2193, %v2212
          %v2224 = vmul.f32 %v2195, %v2216
          %v2225 = vld [vmem:[%s18] sm:$0xf]
          %v2227 = vlaneseq
          %v2228 = vshrl.u32 %v2227, 7
          %v2229 = vsub.s32 0, %v2228
          %v2230 = vrot.slane %v2225, %v2229
          %v2231 = vlaneseq
          %v2232 = vshrl.u32 %v2231, 7
          %v2233 = vsub.s32 1, %v2232
          %v2234 = vrot.slane %v2225, %v2233
          %v2235 = vlaneseq
          %v2236 = vshrl.u32 %v2235, 7
          %v2237 = vsub.s32 2, %v2236
          %v2238 = vrot.slane %v2225, %v2237
          %v2239 = vlaneseq
          %v2240 = vshrl.u32 %v2239, 7
          %v2241 = vsub.s32 3, %v2240
          %v2242 = vrot.slane %v2225, %v2241
          %v2247 = vadd.f32 %v2221, %v2230
          %v2248 = vadd.f32 %v2222, %v2234
          %v2249 = vadd.f32 %v2223, %v2238
          %v2250 = vadd.f32 %v2224, %v2242
          %v2251 = vmax.f32 %v2247, 0.0
          %v2252 = vmax.f32 %v2248, 0.0
          %v2253 = vmax.f32 %v2249, 0.0
          %v2254 = vmax.f32 %v2250, 0.0
          %v2255 = vpack.c.bf16 %v2251, %v2251
          %v2256 = vpack.c.bf16 %v2252, %v2252
          %v2257 = vpack.c.bf16 %v2253, %v2253
          %v2258 = vpack.c.bf16 %v2254, %v2254
          %v2259 = vld [vmem:[%s19] sm:$0xf]
          %v2260 = vld [vmem:[%s19 + $0x4] sm:$0xf]
          %v2261 = vld [vmem:[%s19 + $0x8] sm:$0xf]
          %v2262 = vld [vmem:[%s19 + $0xc] sm:$0xf]
          %v2263 = vld [vmem:[%s19 + $0x10] sm:$0xf]
          %v2264 = vld [vmem:[%s19 + $0x14] sm:$0xf]
          %v2265 = vld [vmem:[%s19 + $0x18] sm:$0xf]
          %v2266 = vld [vmem:[%s19 + $0x1c] sm:$0xf]
          %v2267 = vld [vmem:[%s19 + $0x20] sm:$0xf]
          %v2268 = vld [vmem:[%s19 + $0x24] sm:$0xf]
          %v2269 = vld [vmem:[%s19 + $0x28] sm:$0xf]
          %v2270 = vld [vmem:[%s19 + $0x2c] sm:$0xf]
          %v2271 = vld [vmem:[%s19 + $0x30] sm:$0xf]
          %v2272 = vld [vmem:[%s19 + $0x34] sm:$0xf]
          %v2273 = vld [vmem:[%s19 + $0x38] sm:$0xf]
          %v2274 = vld [vmem:[%s19 + $0x3c] sm:$0xf]
          %v2275 = vld [vmem:[%s19 + $0x40] sm:$0xf]
          %v2276 = vld [vmem:[%s19 + $0x44] sm:$0xf]
          %v2277 = vld [vmem:[%s19 + $0x48] sm:$0xf]
          %v2278 = vld [vmem:[%s19 + $0x4c] sm:$0xf]
          %v2279 = vld [vmem:[%s19 + $0x50] sm:$0xf]
          %v2280 = vld [vmem:[%s19 + $0x54] sm:$0xf]
          %v2281 = vld [vmem:[%s19 + $0x58] sm:$0xf]
          %v2282 = vld [vmem:[%s19 + $0x5c] sm:$0xf]
          %v2283 = vld [vmem:[%s19 + $0x60] sm:$0xf]
          %v2284 = vld [vmem:[%s19 + $0x64] sm:$0xf]
          %v2285 = vld [vmem:[%s19 + $0x68] sm:$0xf]
          %v2286 = vld [vmem:[%s19 + $0x6c] sm:$0xf]
          %v2287 = vld [vmem:[%s19 + $0x70] sm:$0xf]
          %v2288 = vld [vmem:[%s19 + $0x74] sm:$0xf]
          %v2289 = vld [vmem:[%s19 + $0x78] sm:$0xf]
          %v2290 = vld [vmem:[%s19 + $0x7c] sm:$0xf]
          %v2291 = vld [vmem:[%s19 + $0x80] sm:$0xf]
          %v2292 = vld [vmem:[%s19 + $0x84] sm:$0xf]
          %v2293 = vld [vmem:[%s19 + $0x88] sm:$0xf]
          %v2294 = vld [vmem:[%s19 + $0x8c] sm:$0xf]
          %v2295 = vld [vmem:[%s19 + $0x90] sm:$0xf]
          %v2296 = vld [vmem:[%s19 + $0x94] sm:$0xf]
          %v2297 = vld [vmem:[%s19 + $0x98] sm:$0xf]
          %v2298 = vld [vmem:[%s19 + $0x9c] sm:$0xf]
          %v2299 = vld [vmem:[%s19 + $0xa0] sm:$0xf]
          %v2300 = vld [vmem:[%s19 + $0xa4] sm:$0xf]
          %v2301 = vld [vmem:[%s19 + $0xa8] sm:$0xf]
          %v2302 = vld [vmem:[%s19 + $0xac] sm:$0xf]
          %v2303 = vld [vmem:[%s19 + $0xb0] sm:$0xf]
          %v2304 = vld [vmem:[%s19 + $0xb4] sm:$0xf]
          %v2305 = vld [vmem:[%s19 + $0xb8] sm:$0xf]
          %v2306 = vld [vmem:[%s19 + $0xbc] sm:$0xf]
          %v2307 = vld [vmem:[%s19 + $0xc0] sm:$0xf]
          %v2308 = vld [vmem:[%s19 + $0xc4] sm:$0xf]
          %v2309 = vld [vmem:[%s19 + $0xc8] sm:$0xf]
          %v2310 = vld [vmem:[%s19 + $0xcc] sm:$0xf]
          %v2311 = vld [vmem:[%s19 + $0xd0] sm:$0xf]
          %v2312 = vld [vmem:[%s19 + $0xd4] sm:$0xf]
          %v2313 = vld [vmem:[%s19 + $0xd8] sm:$0xf]
          %v2314 = vld [vmem:[%s19 + $0xdc] sm:$0xf]
          %v2315 = vld [vmem:[%s19 + $0xe0] sm:$0xf]
          %v2316 = vld [vmem:[%s19 + $0xe4] sm:$0xf]
          %v2317 = vld [vmem:[%s19 + $0xe8] sm:$0xf]
          %v2318 = vld [vmem:[%s19 + $0xec] sm:$0xf]
          %v2319 = vld [vmem:[%s19 + $0xf0] sm:$0xf]
          %v2320 = vld [vmem:[%s19 + $0xf4] sm:$0xf]
          %v2321 = vld [vmem:[%s19 + $0xf8] sm:$0xf]
          %v2322 = vld [vmem:[%s19 + $0xfc] sm:$0xf]
          %v2323 = vld [vmem:[%s20] sm:$0x1]
          %v2388 = vunpack.c.l.b16 %v2259
          %v2389 = vunpack.c.l.b16 %v2260
          %v2390 = vunpack.c.l.b16 %v2261
          %v2391 = vunpack.c.l.b16 %v2262
          %v2392 = vunpack.c.l.b16 %v2263
          %v2393 = vunpack.c.l.b16 %v2264
          %v2394 = vunpack.c.l.b16 %v2265
          %v2395 = vunpack.c.l.b16 %v2266
          %v2396 = vunpack.c.l.b16 %v2267
          %v2397 = vunpack.c.l.b16 %v2268
          %v2398 = vunpack.c.l.b16 %v2269
          %v2399 = vunpack.c.l.b16 %v2270
          %v2400 = vunpack.c.l.b16 %v2271
          %v2401 = vunpack.c.l.b16 %v2272
          %v2402 = vunpack.c.l.b16 %v2273
          %v2403 = vunpack.c.l.b16 %v2274
          %v2404 = vunpack.c.l.b16 %v2275
          %v2405 = vunpack.c.l.b16 %v2276
          %v2406 = vunpack.c.l.b16 %v2277
          %v2407 = vunpack.c.l.b16 %v2278
          %v2408 = vunpack.c.l.b16 %v2279
          %v2409 = vunpack.c.l.b16 %v2280
          %v2410 = vunpack.c.l.b16 %v2281
          %v2411 = vunpack.c.l.b16 %v2282
          %v2412 = vunpack.c.l.b16 %v2283
          %v2413 = vunpack.c.l.b16 %v2284
          %v2414 = vunpack.c.l.b16 %v2285
          %v2415 = vunpack.c.l.b16 %v2286
          %v2416 = vunpack.c.l.b16 %v2287
          %v2417 = vunpack.c.l.b16 %v2288
          %v2418 = vunpack.c.l.b16 %v2289
          %v2419 = vunpack.c.l.b16 %v2290
          %v2420 = vunpack.c.l.b16 %v2291
          %v2421 = vunpack.c.l.b16 %v2292
          %v2422 = vunpack.c.l.b16 %v2293
          %v2423 = vunpack.c.l.b16 %v2294
          %v2424 = vunpack.c.l.b16 %v2295
          %v2425 = vunpack.c.l.b16 %v2296
          %v2426 = vunpack.c.l.b16 %v2297
          %v2427 = vunpack.c.l.b16 %v2298
          %v2428 = vunpack.c.l.b16 %v2299
          %v2429 = vunpack.c.l.b16 %v2300
          %v2430 = vunpack.c.l.b16 %v2301
          %v2431 = vunpack.c.l.b16 %v2302
          %v2432 = vunpack.c.l.b16 %v2303
          %v2433 = vunpack.c.l.b16 %v2304
          %v2434 = vunpack.c.l.b16 %v2305
          %v2435 = vunpack.c.l.b16 %v2306
          %v2436 = vunpack.c.l.b16 %v2307
          %v2437 = vunpack.c.l.b16 %v2308
          %v2438 = vunpack.c.l.b16 %v2309
          %v2439 = vunpack.c.l.b16 %v2310
          %v2440 = vunpack.c.l.b16 %v2311
          %v2441 = vunpack.c.l.b16 %v2312
          %v2442 = vunpack.c.l.b16 %v2313
          %v2443 = vunpack.c.l.b16 %v2314
          %v2444 = vunpack.c.l.b16 %v2315
          %v2445 = vunpack.c.l.b16 %v2316
          %v2446 = vunpack.c.l.b16 %v2317
          %v2447 = vunpack.c.l.b16 %v2318
          %v2448 = vunpack.c.l.b16 %v2319
          %v2449 = vunpack.c.l.b16 %v2320
          %v2450 = vunpack.c.l.b16 %v2321
          %v2451 = vunpack.c.l.b16 %v2322
          %v2452 = vpack.c.b16 %v2389, %v2388
          %v2453 = vpack.c.b16 %v2391, %v2390
          %v2454 = vpack.c.b16 %v2393, %v2392
          %v2455 = vpack.c.b16 %v2395, %v2394
          %v2456 = vpack.c.b16 %v2397, %v2396
          %v2457 = vpack.c.b16 %v2399, %v2398
          %v2458 = vpack.c.b16 %v2401, %v2400
          %v2459 = vpack.c.b16 %v2403, %v2402
          %v2460 = vpack.c.b16 %v2405, %v2404
          %v2461 = vpack.c.b16 %v2407, %v2406
          %v2462 = vpack.c.b16 %v2409, %v2408
          %v2463 = vpack.c.b16 %v2411, %v2410
          %v2464 = vpack.c.b16 %v2413, %v2412
          %v2465 = vpack.c.b16 %v2415, %v2414
          %v2466 = vpack.c.b16 %v2417, %v2416
          %v2467 = vpack.c.b16 %v2419, %v2418
          %v2468 = vpack.c.b16 %v2421, %v2420
          %v2469 = vpack.c.b16 %v2423, %v2422
          %v2470 = vpack.c.b16 %v2425, %v2424
          %v2471 = vpack.c.b16 %v2427, %v2426
          %v2472 = vpack.c.b16 %v2429, %v2428
          %v2473 = vpack.c.b16 %v2431, %v2430
          %v2474 = vpack.c.b16 %v2433, %v2432
          %v2475 = vpack.c.b16 %v2435, %v2434
          %v2476 = vpack.c.b16 %v2437, %v2436
          %v2477 = vpack.c.b16 %v2439, %v2438
          %v2478 = vpack.c.b16 %v2441, %v2440
          %v2479 = vpack.c.b16 %v2443, %v2442
          %v2480 = vpack.c.b16 %v2445, %v2444
          %v2481 = vpack.c.b16 %v2447, %v2446
          %v2482 = vpack.c.b16 %v2449, %v2448
          %v2483 = vpack.c.b16 %v2451, %v2450
          %2516 = vmatprep.subr.bf16.mxu0 0
          %2517 = vmatpush1.bf16.msra.mxu0 %v2452
          %2518 = vmatprep.subr.bf16.mxu0 0
          %2519 = vmatpush1.bf16.msra.mxu0 %v2453
          %2520 = vmatprep.subr.bf16.mxu0 0
          %2521 = vmatpush1.bf16.msra.mxu0 %v2454
          %2522 = vmatprep.subr.bf16.mxu0 0
          %2523 = vmatpush1.bf16.msra.mxu0 %v2455
          %2524 = vmatprep.subr.bf16.mxu0 0
          %2525 = vmatpush1.bf16.msra.mxu0 %v2456
          %2526 = vmatprep.subr.bf16.mxu0 0
          %2527 = vmatpush1.bf16.msra.mxu0 %v2457
          %2528 = vmatprep.subr.bf16.mxu0 0
          %2529 = vmatpush1.bf16.msra.mxu0 %v2458
          %2530 = vmatprep.subr.bf16.mxu0 0
          %2531 = vmatpush1.bf16.msra.mxu0 %v2459
          %2532 = vmatprep.subr.bf16.mxu0 0
          %2533 = vmatpush1.bf16.msra.mxu0 %v2460
          %2534 = vmatprep.subr.bf16.mxu0 0
          %2535 = vmatpush1.bf16.msra.mxu0 %v2461
          %2536 = vmatprep.subr.bf16.mxu0 0
          %2537 = vmatpush1.bf16.msra.mxu0 %v2462
          %2538 = vmatprep.subr.bf16.mxu0 0
          %2539 = vmatpush1.bf16.msra.mxu0 %v2463
          %2540 = vmatprep.subr.bf16.mxu0 0
          %2541 = vmatpush1.bf16.msra.mxu0 %v2464
          %2542 = vmatprep.subr.bf16.mxu0 0
          %2543 = vmatpush1.bf16.msra.mxu0 %v2465
          %2544 = vmatprep.subr.bf16.mxu0 0
          %2545 = vmatpush1.bf16.msra.mxu0 %v2466
          %2546 = vmatprep.subr.bf16.mxu0 0
          %2547 = vmatpush1.bf16.msra.mxu0 %v2467
          %2548 = vmatprep.mubr.bf16.mxu0 %v2256
          %2549 = vmatmul.mubr.bf16.gmra.mrb[0].mxu0 %v2255
          %v2550 = vpop.f32.mrb[0].mxu0
          %v2551 = vadd.f32 %v2323, %v2550
          %v2552 = vpop.f32.mrb[0].mxu0
          %v2553 = vpop.f32.mrb[0].mxu0
          %v2554 = vpop.f32.mrb[0].mxu0
          %2555 = vdwg.mxu0
          %2556 = vmatprep.subr.bf16.mxu0 0
          %2557 = vmatpush1.bf16.msra.mxu0 %v2468
          %2558 = vmatprep.subr.bf16.mxu0 0
          %2559 = vmatpush1.bf16.msra.mxu0 %v2469
          %2560 = vmatprep.subr.bf16.mxu0 0
          %2561 = vmatpush1.bf16.msra.mxu0 %v2470
          %2562 = vmatprep.subr.bf16.mxu0 0
          %2563 = vmatpush1.bf16.msra.mxu0 %v2471
          %2564 = vmatprep.subr.bf16.mxu0 0
          %2565 = vmatpush1.bf16.msra.mxu0 %v2472
          %2566 = vmatprep.subr.bf16.mxu0 0
          %2567 = vmatpush1.bf16.msra.mxu0 %v2473
          %2568 = vmatprep.subr.bf16.mxu0 0
          %2569 = vmatpush1.bf16.msra.mxu0 %v2474
          %2570 = vmatprep.subr.bf16.mxu0 0
          %2571 = vmatpush1.bf16.msra.mxu0 %v2475
          %2572 = vmatprep.subr.bf16.mxu0 0
          %2573 = vmatpush1.bf16.msra.mxu0 %v2476
          %2574 = vmatprep.subr.bf16.mxu0 0
          %2575 = vmatpush1.bf16.msra.mxu0 %v2477
          %2576 = vmatprep.subr.bf16.mxu0 0
          %2577 = vmatpush1.bf16.msra.mxu0 %v2478
          %2578 = vmatprep.subr.bf16.mxu0 0
          %2579 = vmatpush1.bf16.msra.mxu0 %v2479
          %2580 = vmatprep.subr.bf16.mxu0 0
          %2581 = vmatpush1.bf16.msra.mxu0 %v2480
          %2582 = vmatprep.subr.bf16.mxu0 0
          %2583 = vmatpush1.bf16.msra.mxu0 %v2481
          %2584 = vmatprep.subr.bf16.mxu0 0
          %2585 = vmatpush1.bf16.msra.mxu0 %v2482
          %2586 = vmatprep.subr.bf16.mxu0 0
          %2587 = vmatpush1.bf16.msra.mxu0 %v2483
          %2588 = vmatprep.mubr.bf16.mxu0 %v2258
          %2589 = vmatmul.mubr.bf16.gmra.mrb[0].mxu0 %v2257
          %v2590 = vpop.f32.mrb[0].mxu0
          %v2591 = vadd.f32 %v2551, %v2590
          %v2592 = vpop.f32.mrb[0].mxu0
          %v2593 = vpop.f32.mrb[0].mxu0
          %v2594 = vpop.f32.mrb[0].mxu0
          %2595 = vdwg.mxu0
          %2596 = vst [vmem:[%s671] sm:$0x1] %v2591
        $region112: #{tpu_custom_call.1} parent=103 // pred_fallthru
          _
        %s2597 = sand.u32 %s503, 1
        %s2598 = scalar_lea.sflag [#allocation4], %s2597
        %s2599 = sand.u32 %s503, 1
        %s2600 = scalar_lea.vmem [#allocation3], %s2599
        // Predicated region
        $region113: #{tpu_custom_call.1} parent=103 // pred_check
          %p2601 = pneg %p513
        $region114: #{tpu_custom_call.1} parent=103 // pred_check_branch
          %2603 = sbr.rel (%p2601) target = $region116
        $region115: #{tpu_custom_call.1} parent=103 // pred_region
          %s2605 = ssub.s32 16, 16
          %2606 = vsyncadd %s2598, %s2605
          %s2607 = smul.addr %s39, 16
          %s2608 = scalar_lea.hbm %s21, %s2607
          %s2610 = sshll.u32 %s2600, 4
          %s2611 = int_to_ptr.vmem [resolvable:$true] %s2610
          %2613 = dma.vmem_to_hbm [thread:$0]  %s2611, 16, %s2608, %s2598
        $region116: #{tpu_custom_call.1} parent=103 // pred_fallthru
          _
      $region104: #{tpu_custom_call.1} parent=5 // pred_fallthru
        _
      %p2614 = scmp.le.s32.totalorder 2, %s30
      // Predicated region
      $region117: #{tpu_custom_call.1} parent=5 // pred_check
        %p2615 = pneg %p2614
      $region118: #{tpu_custom_call.1} parent=5 // pred_check_branch
        %2617 = sbr.rel (%p2615) target = $region120
      $region119: #{tpu_custom_call.1} parent=5 // pred_region
        %s2618 = ssub.s32 %s30, 2
        // Predicated region
        $region121: #{tpu_custom_call.1} parent=119 // pred_check
          %p2619 = pneg %p519
        $region122: #{tpu_custom_call.1} parent=119 // pred_check_branch
          %2621 = sbr.rel (%p2619) target = $region124
        $region123: #{tpu_custom_call.1} parent=119 // pred_region
          %s2622 = sand.u32 %s504, 1
          %s2623 = scalar_lea.sflag [#allocation4], %s2622
          %s2624 = sand.u32 %s504, 1
          %s2625 = scalar_lea.vmem [#allocation3], %s2624
          %2626 = dma.done %s2623, 16
        $region124: #{tpu_custom_call.1} parent=119 // pred_fallthru
          _
      $region120: #{tpu_custom_call.1} parent=5 // pred_fallthru
        _
    $region6: #{tpu_custom_call.1} parent=1 // loop_footer
      %s34 = sadd.s32 1, %s30
    $region7: #{tpu_custom_call.1} parent=1 // loop_footer_branch
      %29 = sbr.rel target = $region3
    $region8: #{tpu_custom_call.1} parent=1 // loop_exit
      _
    %2627 = vsyncpa [#allocation4], 1
    %s2628 = scalar_lea.sflag [#allocation4], 1
    %2629 = vsyncpa %s2628, 1

</llo_original>
